<compile_context>
chip_gen: v5e
topology: v5e:2x2
jax: 0.10.0
libtpu: 0.0.40
codegen_flags: <defaults>
</compile_context>

<pallas_src>
import functools

import jax
import jax.numpy as jnp
from jax.experimental import pallas as pl
from jax.experimental.pallas import tpu as pltpu

K_SIZE = 5
PAD = 2
BN_EPS = 1e-5
LANE = 128
SUBLANE = 8


def _round_up(x, m):
    return (x + m - 1) // m * m


def _vmem_limit_bytes():
    """Generation-aware VMEM budget: ~3/4 of physical, clamped to [32, 96] MiB."""
    try:
        cap = int(getattr(pltpu.get_tpu_info(), "vmem_capacity_bytes", 64 << 20))
    except Exception:
        cap = 64 << 20
    return max(32 << 20, min((cap * 3) // 4, 96 << 20))


def _pick_batch_tile(n, lp, target_rows=512):
    """Largest divisor of n with bt*lp <= target_rows, keeping >=2 grid steps when n>=2."""
    best = 1
    for bt in range(1, n + 1):
        if n % bt:
            continue
        if bt * lp > target_rows:
            continue
        if n >= 2 and n // bt < 2:
            continue
        best = bt
    return best


# ---------------------------------------------------------------------------
# In-kernel helpers
# ---------------------------------------------------------------------------
def _interior_mask(bt, lp, l):
    """(bt*lp, 1) bool mask selecting the real (non-pad) rows of the flat layout."""
    pos = jax.lax.broadcasted_iota(jnp.int32, (bt * lp, 1), 0)
    m = None
    for b in range(bt):  # bt is a small static int
        lo = b * lp + PAD
        c = jnp.logical_and(pos >= lo, pos < lo + l)
        m = c if m is None else jnp.logical_or(m, c)
    return m


def _conv5_flat(h_bf, w_ref):
    """'same' conv (k=5, p=2) over the flat padded layout as 5 accumulated MXU dots.

    h_bf : (M, Cin_p) bf16; per-element pad rows MUST already be zero.
    w_ref: (K, Cin_p, Cout_p) bf16 weight ref.
    Returns (M, Cout_p) f32; rows outside the interior mask are garbage and must be
    masked by the caller.
    """
    m = h_bf.shape[0]
    z = jnp.zeros((PAD, h_bf.shape[1]), h_bf.dtype)
    hp = jnp.concatenate([z, h_bf, z], axis=0)                     # (M + 4, Cin_p)
    acc = jnp.dot(hp[0:m, :], w_ref[0], preferred_element_type=jnp.float32)
    for k in range(1, K_SIZE):
        acc = acc + jnp.dot(hp[k:k + m, :], w_ref[k],
                            preferred_element_type=jnp.float32)
    return acc


def _store_conv_and_stats(acc, mask, y_ref, st_ref):
    """Mask pad rows, store bf16 activations, emit per-block [sum, sumsq] (f32 acc)."""
    acc = jnp.where(mask, acc, 0.0)
    y_ref[...] = acc.astype(y_ref.dtype)
    st_ref[...] = jnp.concatenate(
        [jnp.sum(acc, axis=0, keepdims=True),
         jnp.sum(acc * acc, axis=0, keepdims=True)], axis=0)


# ---------------------------------------------------------------------------
# Kernel bodies
# ---------------------------------------------------------------------------
def _conv1_kernel(x_ref, w_ref, y_ref, st_ref, *, bt, lp, l):
    mask = _interior_mask(bt, lp, l)
    acc = _conv5_flat(x_ref[...], w_ref)
    _store_conv_and_stats(acc, mask, y_ref, st_ref)


def _bn_relu_conv2_kernel(y1_ref, sc_ref, sh_ref, w_ref, y_ref, st_ref, *, bt, lp, l):
    mask = _interior_mask(bt, lp, l)
    h = y1_ref[...].astype(jnp.float32) * sc_ref[...] + sh_ref[...]
    h = jnp.where(mask, jnp.maximum(h, 0.0), 0.0).astype(jnp.bfloat16)
    acc = _conv5_flat(h, w_ref)
    _store_conv_and_stats(acc, mask, y_ref, st_ref)


def _bn_relu_out_kernel(y2_ref, sc_ref, sh_ref, o_ref, *, bt, lp, l, co8):
    # BN2 + ReLU, then fuse the channel-unpad + NLC->NCL transpose into the store.
    y = jnp.maximum(y2_ref[...].astype(jnp.float32) * sc_ref[...] + sh_ref[...], 0.0)
    for b in range(bt):  # small static unroll; 2-D transposes go to the XLU
        blk = y[b * lp + PAD: b * lp + PAD + l, :]   # (L, Cop)
        o_ref[b] = blk.T[:co8, :]                    # (co8, L)


# ---------------------------------------------------------------------------
# Wrapper: three batch-packed pallas_calls + tiny JAX stat reductions in between.
# ---------------------------------------------------------------------------
def _bn_affine(stats, count, gamma, beta):
    """Fold training-mode BatchNorm into per-channel (scale, shift).

    stats: (NB, 2, Cp) per-block [sum, sumsq]; gamma/beta: (1, Cp).
    NOTE: one-pass E[x^2]-E[x]^2 variance in f32 (clamped); adequate here, switch to
    shifted sums if N*L gets very large with a large mean."""
    s = jnp.sum(stats[:, 0, :], axis=0)
    ss = jnp.sum(stats[:, 1, :], axis=0)
    mean = s / count
    var = jnp.maximum(ss / count - mean * mean, 0.0)
    scale = gamma * jax.lax.rsqrt(var + BN_EPS)
    shift = beta - mean * scale
    return scale, shift


def double_conv_pallas(x_nlc, w1, g1, be1, w2, g2, be2):
    """x_nlc: (N, L, Cin) f32 channels-last.  w*: (K, C_in, C_out).
    Returns (N, Cout, L) f32 (channels-first, i.e. already NCL)."""
    N, L, Cin = x_nlc.shape
    K, _, Co = w1.shape
    Cip = _round_up(Cin, LANE)
    Cop = _round_up(Co, LANE)
    Co8 = _round_up(Co, SUBLANE)
    Lp = _round_up(L + 2 * PAD, SUBLANE)        # per-element padded length (>= L + 4)

    B_TILE = _pick_batch_tile(N, Lp)
    NB = N // B_TILE
    ROWS = B_TILE * Lp

    # Flat padded channels-last bf16 layout: (N*Lp, Cp), pad rows are explicit zeros.
    x_p = jnp.pad(x_nlc.astype(jnp.bfloat16),
                  ((0, 0), (PAD, Lp - L - PAD), (0, Cip - Cin))).reshape(N * Lp, Cip)
    w1_p = jnp.pad(w1, ((0, 0), (0, Cip - Cin), (0, Cop - Co))).astype(jnp.bfloat16)
    w2_p = jnp.pad(w2, ((0, 0), (0, Cop - Co), (0, Cop - Co))).astype(jnp.bfloat16)
    g1_p = jnp.pad(g1, (0, Cop - Co)).reshape(1, Cop)
    be1_p = jnp.pad(be1, (0, Cop - Co)).reshape(1, Cop)
    g2_p = jnp.pad(g2, (0, Cop - Co)).reshape(1, Cop)
    be2_p = jnp.pad(be2, (0, Cop - Co)).reshape(1, Cop)

    def _stream_in_spec(cols):
        # Deeper buffering only pays off when there are enough grid steps to pipeline.
        if NB >= 4:
            return pl.BlockSpec((ROWS, cols), lambda n: (n, 0),
                                pipeline_mode=pl.Buffered(3))
        return pl.BlockSpec((ROWS, cols), lambda n: (n, 0))

    in_x_spec = _stream_in_spec(Cip)
    in_y_spec = _stream_in_spec(Cop)
    out_act_spec = pl.BlockSpec((ROWS, Cop), lambda n: (n, 0))
    stat_spec = pl.BlockSpec((None, 2, Cop), lambda n: (n, 0, 0))
    vec_spec = pl.BlockSpec((1, Cop), lambda n: (0, 0))
    w1_spec = pl.BlockSpec((K_SIZE, Cip, Cop), lambda n: (0, 0, 0))
    w2_spec = pl.BlockSpec((K_SIZE, Cop, Cop), lambda n: (0, 0, 0))
    out3_spec = pl.BlockSpec((B_TILE, Co8, L), lambda n: (n, 0, 0))

    cp = pltpu.CompilerParams(
        dimension_semantics=("parallel",),
        vmem_limit_bytes=_vmem_limit_bytes(),
    )

    # ---- pass 1: conv1 + per-block stats ----
    y1, st1 = pl.pallas_call(
        functools.partial(_conv1_kernel, bt=B_TILE, lp=Lp, l=L),
        grid=(NB,),
        in_specs=[in_x_spec, w1_spec],
        out_specs=(out_act_spec, stat_spec),
        out_shape=(jax.ShapeDtypeStruct((N * Lp, Cop), jnp.bfloat16),
                   jax.ShapeDtypeStruct((NB, 2, Cop), jnp.float32)),
        compiler_params=cp,
    )(x_p, w1_p)
    scale1, shift1 = _bn_affine(st1, N * L, g1_p, be1_p)

    # ---- pass 2: BN1 + ReLU + conv2 + per-block stats ----
    y2, st2 = pl.pallas_call(
        functools.partial(_bn_relu_conv2_kernel, bt=B_TILE, lp=Lp, l=L),
        grid=(NB,),
        in_specs=[in_y_spec, vec_spec, vec_spec, w2_spec],
        out_specs=(out_act_spec, stat_spec),
        out_shape=(jax.ShapeDtypeStruct((N * Lp, Cop), jnp.bfloat16),
                   jax.ShapeDtypeStruct((NB, 2, Cop), jnp.float32)),
        compiler_params=cp,
    )(y1, scale1, shift1, w2_p)
    scale2, shift2 = _bn_affine(st2, N * L, g2_p, be2_p)

    # ---- pass 3: BN2 + ReLU, fused unpad + transpose -> (N, Co8, L) ----
    out = pl.pallas_call(
        functools.partial(_bn_relu_out_kernel, bt=B_TILE, lp=Lp, l=L, co8=Co8),
        grid=(NB,),
        in_specs=[in_y_spec, vec_spec, vec_spec],
        out_specs=out3_spec,
        out_shape=jax.ShapeDtypeStruct((N, Co8, L), jnp.float32),
        compiler_params=cp,
    )(y2, scale2, shift2)

    return out[:, :Co, :]


# ---------------------------------------------------------------------------
# Glue: Upsample(scale=2, mode='linear', align_corners=True), pad, concat.
# ---------------------------------------------------------------------------
def upsample_linear_1d(x, scale_factor=2):
    """(N, C, L) -> (N, C, L*scale), matching nn.Upsample(align_corners=True)."""
    N, C, L = x.shape
    Lout = L * scale_factor
    if L == 1:
        return jnp.repeat(x, Lout, axis=2)
    coords = jnp.arange(Lout, dtype=jnp.float32) * (L - 1) / (Lout - 1)
    i0 = jnp.floor(coords).astype(jnp.int32)
    i1 = jnp.minimum(i0 + 1, L - 1)
    frac = (coords - i0.astype(jnp.float32))[None, None, :]
    return x[:, :, i0] * (1.0 - frac) + x[:, :, i1] * frac


def up_forward(x1, x2, params):
    """x1, x2: (N, C, L) NCL as in PyTorch. Returns (N, out_channels, L2) NCL."""
    w1, b1, g1, be1, w2, b2, g2, be2 = params
    del b1, b2  # conv bias cancels exactly under training-mode BatchNorm -> dropped
    x1u = upsample_linear_1d(x1, 2)
    diff = x2.shape[2] - x1u.shape[2]
    x1p = jnp.pad(x1u, ((0, 0), (0, 0), (diff // 2, diff - diff // 2)))
    x = jnp.concatenate([x2, x1p], axis=1)           # (N, in_channels, L2)
    x_nlc = jnp.transpose(x, (0, 2, 1))              # channels-last for the kernels
    # pass 3 already emits NCL, so no output transpose / channel slice round trip.
    return double_conv_pallas(x_nlc, w1, g1, be1, w2, g2, be2)


# ---------------------------------------------------------------------------
# Parameter init (PyTorch-like shapes) and a pure-JAX reference.
# ---------------------------------------------------------------------------
def init_params(key, in_ch, out_ch):
    k1, k2, k3, k4, k5, k6, k7, k8 = jax.random.split(key, 8)
    bound1 = float(1.0 / (in_ch * K_SIZE) ** 0.5)
    bound2 = float(1.0 / (out_ch * K_SIZE) ** 0.5)
    # PyTorch Conv1d weight is (out_ch, in_ch, K); kernels use (K, in_ch, out_ch).
    w1 = jnp.transpose(
        jax.random.uniform(k1, (out_ch, in_ch, K_SIZE), jnp.float32, -bound1, bound1), (2, 1, 0))
    b1 = jax.random.uniform(k2, (out_ch,), jnp.float32, -bound1, bound1)
    w2 = jnp.transpose(
        jax.random.uniform(k3, (out_ch, out_ch, K_SIZE), jnp.float32, -bound2, bound2), (2, 1, 0))
    b2 = jax.random.uniform(k4, (out_ch,), jnp.float32, -bound2, bound2)
    g1 = jax.random.uniform(k5, (out_ch,), jnp.float32, 0.5, 1.5)
    be1 = jax.random.uniform(k6, (out_ch,), jnp.float32, -0.5, 0.5)
    g2 = jax.random.uniform(k7, (out_ch,), jnp.float32, 0.5, 1.5)
    be2 = jax.random.uniform(k8, (out_ch,), jnp.float32, -0.5, 0.5)
    return (w1, b1, g1, be1, w2, b2, g2, be2)


def _ref_double_conv(x_nlc, w1, g1, be1, w2, g2, be2):
    """Pure-JAX reference with the same rounding points as the Pallas pipeline
    (bf16 matmul operands / intermediates, BN stats from the f32 accumulator)."""
    def conv(h, w):                                   # h: (N, L, C) f32, w: (K, C, Co) f32
        n, l, _ = h.shape
        hb = jnp.pad(h.astype(jnp.bfloat16), ((0, 0), (PAD, PAD), (0, 0)))
        wb = w.astype(jnp.bfloat16)
        acc = jnp.zeros((n, l, w.shape[-1]), jnp.float32)
        for k in range(K_SIZE):
            acc = acc + jnp.einsum('nlc,cd->nld', hb[:, k:k + l, :], wb[k],
                                   preferred_element_type=jnp.float32)
        return acc

    def bn_affine(acc, g, be):
        cnt = acc.shape[0] * acc.shape[1]
        mean = jnp.sum(acc, axis=(0, 1)) / cnt
        var = jnp.maximum(jnp.sum(acc * acc, axis=(0, 1)) / cnt - mean * mean, 0.0)
        scale = g * jax.lax.rsqrt(var + BN_EPS)
        return scale, be - mean * scale

    acc1 = conv(x_nlc, w1)
    sc1, sh1 = bn_affine(acc1, g1, be1)
    h = jnp.maximum(acc1.astype(jnp.bfloat16).astype(jnp.float32) * sc1 + sh1, 0.0)
    acc2 = conv(h, w2)
    sc2, sh2 = bn_affine(acc2, g2, be2)
    return jnp.maximum(acc2.astype(jnp.bfloat16).astype(jnp.float32) * sc2 + sh2, 0.0)


if __name__ == "__main__":
    key = jax.random.PRNGKey(0)
    kx1, kx2, kp = jax.random.split(key, 3)

    in_channels, out_channels = 8, 8
    N, L1, L2 = 2, 8, 16                     # x1 upsampled 2x -> length 16 == len(x2)
    x1 = jax.random.normal(kx1, (N, in_channels // 2, L1), jnp.float32)
    x2 = jax.random.normal(kx2, (N, in_channels // 2, L2), jnp.float32)
    params = init_params(kp, in_channels, out_channels)

    fwd = jax.jit(up_forward)
    out = jax.block_until_ready(fwd(x1, x2, params))
    assert out.shape == (N, out_channels, L2), out.shape

    # sanity check vs pure-JAX reference (tolerance absorbs bf16-intermediate noise)
    w1, b1, g1, be1, w2, b2, g2, be2 = params
    x1u = upsample_linear_1d(x1, 2)
    diff = x2.shape[2] - x1u.shape[2]
    x1p = jnp.pad(x1u, ((0, 0), (0, 0), (diff // 2, diff - diff // 2)))
    x_nlc = jnp.transpose(jnp.concatenate([x2, x1p], axis=1), (0, 2, 1))
    ref = jnp.transpose(_ref_double_conv(x_nlc, w1, g1, be1, w2, g2, be2), (0, 2, 1))
    err = float(jnp.max(jnp.abs(out - ref)))
    assert jnp.allclose(out, ref, rtol=2e-2, atol=2e-2), err

    print("KERNEL_OK")
</pallas_src>

<mosaic_0001>
module attributes {stable_mosaic.version = 11 : i64} {
  func.func @_bn_relu_conv2_kernel(%arg0: i32, %arg1: memref<24x128xbf16, #tpu.memory_space<vmem>>, %arg2: memref<1x128xf32, #tpu.memory_space<vmem>>, %arg3: memref<1x128xf32, #tpu.memory_space<vmem>>, %arg4: memref<5x128x128xbf16, #tpu.memory_space<vmem>>, %arg5: memref<24x128xbf16, #tpu.memory_space<vmem>>, %arg6: memref<1x2x128xf32, #tpu.memory_space<vmem>>) attributes {dimension_semantics = [#tpu.dimension_semantics<parallel>], iteration_bounds = array<i64: 2>, scalar_prefetch = 0 : i64, scratch_operands = 0 : i64, tpu.core_type = #tpu.core_type<tc>, window_params = [{transform_indices = @transform_0, window_bounds = array<i64: 24, 128>}, {pipeline_mode = #tpu.pipeline_mode<synchronous>, transform_indices = @transform_1, window_bounds = array<i64: 1, 128>}, {pipeline_mode = #tpu.pipeline_mode<synchronous>, transform_indices = @transform_2, window_bounds = array<i64: 1, 128>}, {pipeline_mode = #tpu.pipeline_mode<synchronous>, transform_indices = @transform_3, window_bounds = array<i64: 5, 128, 128>}, {transform_indices = @transform_4, window_bounds = array<i64: 24, 128>}, {transform_indices = @transform_5, window_bounds = array<i64: 1, 2, 128>}]} {
    %0 = tpu.iota {dimensions = array<i32: 0>} : vector<24x1xi32>
    %c2_i32 = arith.constant 2 : i32
    %1 = vector.broadcast %c2_i32 : i32 to vector<24x1xi32>
    %2 = arith.cmpi sge, %0, %1 : vector<24x1xi32>
    %c18_i32 = arith.constant 18 : i32
    %3 = vector.broadcast %c18_i32 : i32 to vector<24x1xi32>
    %4 = arith.cmpi slt, %0, %3 : vector<24x1xi32>
    %5 = arith.andi %2, %4 : vector<24x1xi1>
    %c0 = arith.constant 0 : index
    %c0_0 = arith.constant 0 : index
    %6 = vector.load %arg1[%c0, %c0_0] : memref<24x128xbf16, #tpu.memory_space<vmem>>, vector<24x128xbf16>
    %7 = arith.extf %6 : vector<24x128xbf16> to vector<24x128xf32>
    %c0_1 = arith.constant 0 : index
    %c0_2 = arith.constant 0 : index
    %8 = vector.load %arg2[%c0_1, %c0_2] : memref<1x128xf32, #tpu.memory_space<vmem>>, vector<1x128xf32>
    %9 = vector.broadcast %8 : vector<1x128xf32> to vector<24x128xf32>
    %10 = arith.mulf %7, %9 : vector<24x128xf32>
    %c0_3 = arith.constant 0 : index
    %c0_4 = arith.constant 0 : index
    %11 = vector.load %arg3[%c0_3, %c0_4] : memref<1x128xf32, #tpu.memory_space<vmem>>, vector<1x128xf32>
    %12 = vector.broadcast %11 : vector<1x128xf32> to vector<24x128xf32>
    %13 = arith.addf %10, %12 : vector<24x128xf32>
    %cst = arith.constant 0.000000e+00 : f32
    %14 = vector.broadcast %cst : f32 to vector<24x128xf32>
    %15 = arith.maximumf %13, %14 : vector<24x128xf32>
    %cst_5 = arith.constant 0.000000e+00 : f32
    %16 = vector.shape_cast %5 : vector<24x1xi1> to vector<24x1xi1>
    %17 = vector.broadcast %16 : vector<24x1xi1> to vector<24x128xi1>
    %18 = vector.broadcast %cst_5 : f32 to vector<24x128xf32>
    %19 = arith.select %17, %15, %18 : vector<24x128xi1>, vector<24x128xf32>
    %20 = arith.truncf %19 : vector<24x128xf32> to vector<24x128xbf16>
    %cst_6 = arith.constant 0.000000e+00 : bf16
    %21 = vector.broadcast %cst_6 : bf16 to vector<2x128xbf16>
    %22 = tpu.concatenate %21, %20, %21 in 0 : vector<2x128xbf16>, vector<24x128xbf16>, vector<2x128xbf16> -> vector<28x128xbf16>
    %23 = vector.extract_strided_slice %22 {offsets = [0, 0], sizes = [24, 128], strides = [1, 1]} : vector<28x128xbf16> to vector<24x128xbf16>
    %c0_7 = arith.constant 0 : index
    %c0_8 = arith.constant 0 : index
    %c0_9 = arith.constant 0 : index
    %24 = vector.load %arg4[%c0_7, %c0_8, %c0_9] : memref<5x128x128xbf16, #tpu.memory_space<vmem>>, vector<1x128x128xbf16>
    %25 = vector.shape_cast %24 : vector<1x128x128xbf16> to vector<128x128xbf16>
    %cst_10 = arith.constant dense<0.000000e+00> : vector<24x128xf32>
    %26 = tpu.matmul %23, %25, %cst_10 {dimension_numbers = #tpu.dot_dimension_numbers<[1], [0], [0], [1], [0, 0, 1, 1], [], []>} : vector<24x128xbf16>, vector<128x128xbf16>, vector<24x128xf32> -> vector<24x128xf32>
    %27 = vector.extract_strided_slice %22 {offsets = [1, 0], sizes = [24, 128], strides = [1, 1]} : vector<28x128xbf16> to vector<24x128xbf16>
    %c1 = arith.constant 1 : index
    %c0_11 = arith.constant 0 : index
    %c0_12 = arith.constant 0 : index
    %28 = vector.load %arg4[%c1, %c0_11, %c0_12] : memref<5x128x128xbf16, #tpu.memory_space<vmem>>, vector<1x128x128xbf16>
    %29 = vector.shape_cast %28 : vector<1x128x128xbf16> to vector<128x128xbf16>
    %cst_13 = arith.constant dense<0.000000e+00> : vector<24x128xf32>
    %30 = tpu.matmul %27, %29, %cst_13 {dimension_numbers = #tpu.dot_dimension_numbers<[1], [0], [0], [1], [0, 0, 1, 1], [], []>} : vector<24x128xbf16>, vector<128x128xbf16>, vector<24x128xf32> -> vector<24x128xf32>
    %31 = arith.addf %26, %30 : vector<24x128xf32>
    %32 = vector.extract_strided_slice %22 {offsets = [2, 0], sizes = [24, 128], strides = [1, 1]} : vector<28x128xbf16> to vector<24x128xbf16>
    %c2 = arith.constant 2 : index
    %c0_14 = arith.constant 0 : index
    %c0_15 = arith.constant 0 : index
    %33 = vector.load %arg4[%c2, %c0_14, %c0_15] : memref<5x128x128xbf16, #tpu.memory_space<vmem>>, vector<1x128x128xbf16>
    %34 = vector.shape_cast %33 : vector<1x128x128xbf16> to vector<128x128xbf16>
    %cst_16 = arith.constant dense<0.000000e+00> : vector<24x128xf32>
    %35 = tpu.matmul %32, %34, %cst_16 {dimension_numbers = #tpu.dot_dimension_numbers<[1], [0], [0], [1], [0, 0, 1, 1], [], []>} : vector<24x128xbf16>, vector<128x128xbf16>, vector<24x128xf32> -> vector<24x128xf32>
    %36 = arith.addf %31, %35 : vector<24x128xf32>
    %37 = vector.extract_strided_slice %22 {offsets = [3, 0], sizes = [24, 128], strides = [1, 1]} : vector<28x128xbf16> to vector<24x128xbf16>
    %c3 = arith.constant 3 : index
    %c0_17 = arith.constant 0 : index
    %c0_18 = arith.constant 0 : index
    %38 = vector.load %arg4[%c3, %c0_17, %c0_18] : memref<5x128x128xbf16, #tpu.memory_space<vmem>>, vector<1x128x128xbf16>
    %39 = vector.shape_cast %38 : vector<1x128x128xbf16> to vector<128x128xbf16>
    %cst_19 = arith.constant dense<0.000000e+00> : vector<24x128xf32>
    %40 = tpu.matmul %37, %39, %cst_19 {dimension_numbers = #tpu.dot_dimension_numbers<[1], [0], [0], [1], [0, 0, 1, 1], [], []>} : vector<24x128xbf16>, vector<128x128xbf16>, vector<24x128xf32> -> vector<24x128xf32>
    %41 = arith.addf %36, %40 : vector<24x128xf32>
    %42 = vector.extract_strided_slice %22 {offsets = [4, 0], sizes = [24, 128], strides = [1, 1]} : vector<28x128xbf16> to vector<24x128xbf16>
    %c4 = arith.constant 4 : index
    %c0_20 = arith.constant 0 : index
    %c0_21 = arith.constant 0 : index
    %43 = vector.load %arg4[%c4, %c0_20, %c0_21] : memref<5x128x128xbf16, #tpu.memory_space<vmem>>, vector<1x128x128xbf16>
    %44 = vector.shape_cast %43 : vector<1x128x128xbf16> to vector<128x128xbf16>
    %cst_22 = arith.constant dense<0.000000e+00> : vector<24x128xf32>
    %45 = tpu.matmul %42, %44, %cst_22 {dimension_numbers = #tpu.dot_dimension_numbers<[1], [0], [0], [1], [0, 0, 1, 1], [], []>} : vector<24x128xbf16>, vector<128x128xbf16>, vector<24x128xf32> -> vector<24x128xf32>
    %46 = arith.addf %41, %45 : vector<24x128xf32>
    %cst_23 = arith.constant 0.000000e+00 : f32
    %47 = vector.shape_cast %5 : vector<24x1xi1> to vector<24x1xi1>
    %48 = vector.broadcast %47 : vector<24x1xi1> to vector<24x128xi1>
    %49 = vector.broadcast %cst_23 : f32 to vector<24x128xf32>
    %50 = arith.select %48, %46, %49 : vector<24x128xi1>, vector<24x128xf32>
    %51 = arith.truncf %50 : vector<24x128xf32> to vector<24x128xbf16>
    %c0_24 = arith.constant 0 : index
    %c0_25 = arith.constant 0 : index
    %52 = vector.load %arg5[%c0_24, %c0_25] : memref<24x128xbf16, #tpu.memory_space<vmem>>, vector<24x128xbf16>
    tpu.vector_store %arg5[%c0_24, %c0_25], %51 {strides = array<i32>} : memref<24x128xbf16, #tpu.memory_space<vmem>>, vector<24x128xbf16>,
    %cst_26 = arith.constant dense<0.000000e+00> : vector<128xf32>
    %53 = vector.multi_reduction <add>, %50, %cst_26 [0] : vector<24x128xf32> to vector<128xf32>
    %54 = vector.shape_cast %53 : vector<128xf32> to vector<1x128xf32>
    %55 = arith.mulf %50, %50 : vector<24x128xf32>
    %cst_27 = arith.constant dense<0.000000e+00> : vector<128xf32>
    %56 = vector.multi_reduction <add>, %55, %cst_27 [0] : vector<24x128xf32> to vector<128xf32>
    %57 = vector.shape_cast %56 : vector<128xf32> to vector<1x128xf32>
    %58 = tpu.concatenate %54, %57 in 0 : vector<1x128xf32>, vector<1x128xf32> -> vector<2x128xf32>
    %c0_28 = arith.constant 0 : index
    %c0_29 = arith.constant 0 : index
    %c0_30 = arith.constant 0 : index
    %59 = vector.load %arg6[%c0_28, %c0_29, %c0_30] : memref<1x2x128xf32, #tpu.memory_space<vmem>>, vector<1x2x128xf32>
    %60 = vector.shape_cast %59 : vector<1x2x128xf32> to vector<2x128xf32>
    %61 = vector.shape_cast %58 : vector<2x128xf32> to vector<1x2x128xf32>
    tpu.vector_store %arg6[%c0_28, %c0_29, %c0_30], %61 {strides = array<i32>} : memref<1x2x128xf32, #tpu.memory_space<vmem>>, vector<1x2x128xf32>,
    return
  }
  func.func @transform_0(%arg0: i32) -> (i32, i32) {
    %c0_i32 = arith.constant 0 : i32
    %c0_i32_0 = arith.constant 0 : i32
    return %arg0, %c0_i32 : i32, i32
  }
  func.func @transform_1(%arg0: i32) -> (i32, i32) {
    %c0_i32 = arith.constant 0 : i32
    %c0_i32_0 = arith.constant 0 : i32
    %c0_i32_1 = arith.constant 0 : i32
    return %c0_i32, %c0_i32_0 : i32, i32
  }
  func.func @transform_2(%arg0: i32) -> (i32, i32) {
    %c0_i32 = arith.constant 0 : i32
    %c0_i32_0 = arith.constant 0 : i32
    %c0_i32_1 = arith.constant 0 : i32
    return %c0_i32, %c0_i32_0 : i32, i32
  }
  func.func @transform_3(%arg0: i32) -> (i32, i32, i32) {
    %c0_i32 = arith.constant 0 : i32
    %c0_i32_0 = arith.constant 0 : i32
    %c0_i32_1 = arith.constant 0 : i32
    %c0_i32_2 = arith.constant 0 : i32
    return %c0_i32, %c0_i32_0, %c0_i32_1 : i32, i32, i32
  }
  func.func @transform_4(%arg0: i32) -> (i32, i32) {
    %c0_i32 = arith.constant 0 : i32
    %c0_i32_0 = arith.constant 0 : i32
    return %arg0, %c0_i32 : i32, i32
  }
  func.func @transform_5(%arg0: i32) -> (i32, i32, i32) {
    %c0_i32 = arith.constant 0 : i32
    %c0_i32_0 = arith.constant 0 : i32
    %c0_i32_1 = arith.constant 0 : i32
    return %arg0, %c0_i32, %c0_i32_0 : i32, i32, i32
  }
}

module attributes {stable_mosaic.version = 11 : i64} {
  func.func @_conv1_kernel(%arg0: i32, %arg1: memref<24x128xbf16, #tpu.memory_space<vmem>>, %arg2: memref<5x128x128xbf16, #tpu.memory_space<vmem>>, %arg3: memref<24x128xbf16, #tpu.memory_space<vmem>>, %arg4: memref<1x2x128xf32, #tpu.memory_space<vmem>>) attributes {dimension_semantics = [#tpu.dimension_semantics<parallel>], iteration_bounds = array<i64: 2>, scalar_prefetch = 0 : i64, scratch_operands = 0 : i64, tpu.core_type = #tpu.core_type<tc>, window_params = [{transform_indices = @transform_0, window_bounds = array<i64: 24, 128>}, {pipeline_mode = #tpu.pipeline_mode<synchronous>, transform_indices = @transform_1, window_bounds = array<i64: 5, 128, 128>}, {transform_indices = @transform_2, window_bounds = array<i64: 24, 128>}, {transform_indices = @transform_3, window_bounds = array<i64: 1, 2, 128>}]} {
    %0 = tpu.iota {dimensions = array<i32: 0>} : vector<24x1xi32>
    %c2_i32 = arith.constant 2 : i32
    %1 = vector.broadcast %c2_i32 : i32 to vector<24x1xi32>
    %2 = arith.cmpi sge, %0, %1 : vector<24x1xi32>
    %c18_i32 = arith.constant 18 : i32
    %3 = vector.broadcast %c18_i32 : i32 to vector<24x1xi32>
    %4 = arith.cmpi slt, %0, %3 : vector<24x1xi32>
    %5 = arith.andi %2, %4 : vector<24x1xi1>
    %c0 = arith.constant 0 : index
    %c0_0 = arith.constant 0 : index
    %6 = vector.load %arg1[%c0, %c0_0] : memref<24x128xbf16, #tpu.memory_space<vmem>>, vector<24x128xbf16>
    %cst = arith.constant 0.000000e+00 : bf16
    %7 = vector.broadcast %cst : bf16 to vector<2x128xbf16>
    %8 = tpu.concatenate %7, %6, %7 in 0 : vector<2x128xbf16>, vector<24x128xbf16>, vector<2x128xbf16> -> vector<28x128xbf16>
    %9 = vector.extract_strided_slice %8 {offsets = [0, 0], sizes = [24, 128], strides = [1, 1]} : vector<28x128xbf16> to vector<24x128xbf16>
    %c0_1 = arith.constant 0 : index
    %c0_2 = arith.constant 0 : index
    %c0_3 = arith.constant 0 : index
    %10 = vector.load %arg2[%c0_1, %c0_2, %c0_3] : memref<5x128x128xbf16, #tpu.memory_space<vmem>>, vector<1x128x128xbf16>
    %11 = vector.shape_cast %10 : vector<1x128x128xbf16> to vector<128x128xbf16>
    %cst_4 = arith.constant dense<0.000000e+00> : vector<24x128xf32>
    %12 = tpu.matmul %9, %11, %cst_4 {dimension_numbers = #tpu.dot_dimension_numbers<[1], [0], [0], [1], [0, 0, 1, 1], [], []>} : vector<24x128xbf16>, vector<128x128xbf16>, vector<24x128xf32> -> vector<24x128xf32>
    %13 = vector.extract_strided_slice %8 {offsets = [1, 0], sizes = [24, 128], strides = [1, 1]} : vector<28x128xbf16> to vector<24x128xbf16>
    %c1 = arith.constant 1 : index
    %c0_5 = arith.constant 0 : index
    %c0_6 = arith.constant 0 : index
    %14 = vector.load %arg2[%c1, %c0_5, %c0_6] : memref<5x128x128xbf16, #tpu.memory_space<vmem>>, vector<1x128x128xbf16>
    %15 = vector.shape_cast %14 : vector<1x128x128xbf16> to vector<128x128xbf16>
    %cst_7 = arith.constant dense<0.000000e+00> : vector<24x128xf32>
    %16 = tpu.matmul %13, %15, %cst_7 {dimension_numbers = #tpu.dot_dimension_numbers<[1], [0], [0], [1], [0, 0, 1, 1], [], []>} : vector<24x128xbf16>, vector<128x128xbf16>, vector<24x128xf32> -> vector<24x128xf32>
    %17 = arith.addf %12, %16 : vector<24x128xf32>
    %18 = vector.extract_strided_slice %8 {offsets = [2, 0], sizes = [24, 128], strides = [1, 1]} : vector<28x128xbf16> to vector<24x128xbf16>
    %c2 = arith.constant 2 : index
    %c0_8 = arith.constant 0 : index
    %c0_9 = arith.constant 0 : index
    %19 = vector.load %arg2[%c2, %c0_8, %c0_9] : memref<5x128x128xbf16, #tpu.memory_space<vmem>>, vector<1x128x128xbf16>
    %20 = vector.shape_cast %19 : vector<1x128x128xbf16> to vector<128x128xbf16>
    %cst_10 = arith.constant dense<0.000000e+00> : vector<24x128xf32>
    %21 = tpu.matmul %18, %20, %cst_10 {dimension_numbers = #tpu.dot_dimension_numbers<[1], [0], [0], [1], [0, 0, 1, 1], [], []>} : vector<24x128xbf16>, vector<128x128xbf16>, vector<24x128xf32> -> vector<24x128xf32>
    %22 = arith.addf %17, %21 : vector<24x128xf32>
    %23 = vector.extract_strided_slice %8 {offsets = [3, 0], sizes = [24, 128], strides = [1, 1]} : vector<28x128xbf16> to vector<24x128xbf16>
    %c3 = arith.constant 3 : index
    %c0_11 = arith.constant 0 : index
    %c0_12 = arith.constant 0 : index
    %24 = vector.load %arg2[%c3, %c0_11, %c0_12] : memref<5x128x128xbf16, #tpu.memory_space<vmem>>, vector<1x128x128xbf16>
    %25 = vector.shape_cast %24 : vector<1x128x128xbf16> to vector<128x128xbf16>
    %cst_13 = arith.constant dense<0.000000e+00> : vector<24x128xf32>
    %26 = tpu.matmul %23, %25, %cst_13 {dimension_numbers = #tpu.dot_dimension_numbers<[1], [0], [0], [1], [0, 0, 1, 1], [], []>} : vector<24x128xbf16>, vector<128x128xbf16>, vector<24x128xf32> -> vector<24x128xf32>
    %27 = arith.addf %22, %26 : vector<24x128xf32>
    %28 = vector.extract_strided_slice %8 {offsets = [4, 0], sizes = [24, 128], strides = [1, 1]} : vector<28x128xbf16> to vector<24x128xbf16>
    %c4 = arith.constant 4 : index
    %c0_14 = arith.constant 0 : index
    %c0_15 = arith.constant 0 : index
    %29 = vector.load %arg2[%c4, %c0_14, %c0_15] : memref<5x128x128xbf16, #tpu.memory_space<vmem>>, vector<1x128x128xbf16>
    %30 = vector.shape_cast %29 : vector<1x128x128xbf16> to vector<128x128xbf16>
    %cst_16 = arith.constant dense<0.000000e+00> : vector<24x128xf32>
    %31 = tpu.matmul %28, %30, %cst_16 {dimension_numbers = #tpu.dot_dimension_numbers<[1], [0], [0], [1], [0, 0, 1, 1], [], []>} : vector<24x128xbf16>, vector<128x128xbf16>, vector<24x128xf32> -> vector<24x128xf32>
    %32 = arith.addf %27, %31 : vector<24x128xf32>
    %cst_17 = arith.constant 0.000000e+00 : f32
    %33 = vector.shape_cast %5 : vector<24x1xi1> to vector<24x1xi1>
    %34 = vector.broadcast %33 : vector<24x1xi1> to vector<24x128xi1>
    %35 = vector.broadcast %cst_17 : f32 to vector<24x128xf32>
    %36 = arith.select %34, %32, %35 : vector<24x128xi1>, vector<24x128xf32>
    %37 = arith.truncf %36 : vector<24x128xf32> to vector<24x128xbf16>
    %c0_18 = arith.constant 0 : index
    %c0_19 = arith.constant 0 : index
    %38 = vector.load %arg3[%c0_18, %c0_19] : memref<24x128xbf16, #tpu.memory_space<vmem>>, vector<24x128xbf16>
    tpu.vector_store %arg3[%c0_18, %c0_19], %37 {strides = array<i32>} : memref<24x128xbf16, #tpu.memory_space<vmem>>, vector<24x128xbf16>,
    %cst_20 = arith.constant dense<0.000000e+00> : vector<128xf32>
    %39 = vector.multi_reduction <add>, %36, %cst_20 [0] : vector<24x128xf32> to vector<128xf32>
    %40 = vector.shape_cast %39 : vector<128xf32> to vector<1x128xf32>
    %41 = arith.mulf %36, %36 : vector<24x128xf32>
    %cst_21 = arith.constant dense<0.000000e+00> : vector<128xf32>
    %42 = vector.multi_reduction <add>, %41, %cst_21 [0] : vector<24x128xf32> to vector<128xf32>
    %43 = vector.shape_cast %42 : vector<128xf32> to vector<1x128xf32>
    %44 = tpu.concatenate %40, %43 in 0 : vector<1x128xf32>, vector<1x128xf32> -> vector<2x128xf32>
    %c0_22 = arith.constant 0 : index
    %c0_23 = arith.constant 0 : index
    %c0_24 = arith.constant 0 : index
    %45 = vector.load %arg4[%c0_22, %c0_23, %c0_24] : memref<1x2x128xf32, #tpu.memory_space<vmem>>, vector<1x2x128xf32>
    %46 = vector.shape_cast %45 : vector<1x2x128xf32> to vector<2x128xf32>
    %47 = vector.shape_cast %44 : vector<2x128xf32> to vector<1x2x128xf32>
    tpu.vector_store %arg4[%c0_22, %c0_23, %c0_24], %47 {strides = array<i32>} : memref<1x2x128xf32, #tpu.memory_space<vmem>>, vector<1x2x128xf32>,
    return
  }
  func.func @transform_0(%arg0: i32) -> (i32, i32) {
    %c0_i32 = arith.constant 0 : i32
    %c0_i32_0 = arith.constant 0 : i32
    return %arg0, %c0_i32 : i32, i32
  }
  func.func @transform_1(%arg0: i32) -> (i32, i32, i32) {
    %c0_i32 = arith.constant 0 : i32
    %c0_i32_0 = arith.constant 0 : i32
    %c0_i32_1 = arith.constant 0 : i32
    %c0_i32_2 = arith.constant 0 : i32
    return %c0_i32, %c0_i32_0, %c0_i32_1 : i32, i32, i32
  }
  func.func @transform_2(%arg0: i32) -> (i32, i32) {
    %c0_i32 = arith.constant 0 : i32
    %c0_i32_0 = arith.constant 0 : i32
    return %arg0, %c0_i32 : i32, i32
  }
  func.func @transform_3(%arg0: i32) -> (i32, i32, i32) {
    %c0_i32 = arith.constant 0 : i32
    %c0_i32_0 = arith.constant 0 : i32
    %c0_i32_1 = arith.constant 0 : i32
    return %arg0, %c0_i32, %c0_i32_0 : i32, i32, i32
  }
}

module attributes {stable_mosaic.version = 11 : i64} {
  func.func @_bn_relu_out_kernel(%arg0: i32, %arg1: memref<24x128xbf16, #tpu.memory_space<vmem>>, %arg2: memref<1x128xf32, #tpu.memory_space<vmem>>, %arg3: memref<1x128xf32, #tpu.memory_space<vmem>>, %arg4: memref<1x8x16xf32, #tpu.memory_space<vmem>>) attributes {dimension_semantics = [#tpu.dimension_semantics<parallel>], iteration_bounds = array<i64: 2>, scalar_prefetch = 0 : i64, scratch_operands = 0 : i64, tpu.core_type = #tpu.core_type<tc>, window_params = [{transform_indices = @transform_0, window_bounds = array<i64: 24, 128>}, {pipeline_mode = #tpu.pipeline_mode<synchronous>, transform_indices = @transform_1, window_bounds = array<i64: 1, 128>}, {pipeline_mode = #tpu.pipeline_mode<synchronous>, transform_indices = @transform_2, window_bounds = array<i64: 1, 128>}, {transform_indices = @transform_3, window_bounds = array<i64: 1, 8, 16>}]} {
    %c0 = arith.constant 0 : index
    %c0_0 = arith.constant 0 : index
    %0 = vector.load %arg1[%c0, %c0_0] : memref<24x128xbf16, #tpu.memory_space<vmem>>, vector<24x128xbf16>
    %1 = arith.extf %0 : vector<24x128xbf16> to vector<24x128xf32>
    %c0_1 = arith.constant 0 : index
    %c0_2 = arith.constant 0 : index
    %2 = vector.load %arg2[%c0_1, %c0_2] : memref<1x128xf32, #tpu.memory_space<vmem>>, vector<1x128xf32>
    %3 = vector.broadcast %2 : vector<1x128xf32> to vector<24x128xf32>
    %4 = arith.mulf %1, %3 : vector<24x128xf32>
    %c0_3 = arith.constant 0 : index
    %c0_4 = arith.constant 0 : index
    %5 = vector.load %arg3[%c0_3, %c0_4] : memref<1x128xf32, #tpu.memory_space<vmem>>, vector<1x128xf32>
    %6 = vector.broadcast %5 : vector<1x128xf32> to vector<24x128xf32>
    %7 = arith.addf %4, %6 : vector<24x128xf32>
    %cst = arith.constant 0.000000e+00 : f32
    %8 = vector.broadcast %cst : f32 to vector<24x128xf32>
    %9 = arith.maximumf %7, %8 : vector<24x128xf32>
    %10 = vector.extract_strided_slice %9 {offsets = [2, 0], sizes = [16, 128], strides = [1, 1]} : vector<24x128xf32> to vector<16x128xf32>
    %11 = tpu.transpose %10, [1, 0] : vector<16x128xf32> -> vector<128x16xf32>
    %12 = vector.extract_strided_slice %11 {offsets = [0, 0], sizes = [8, 16], strides = [1, 1]} : vector<128x16xf32> to vector<8x16xf32>
    %c0_5 = arith.constant 0 : index
    %c0_6 = arith.constant 0 : index
    %c0_7 = arith.constant 0 : index
    %13 = vector.load %arg4[%c0_5, %c0_6, %c0_7] : memref<1x8x16xf32, #tpu.memory_space<vmem>>, vector<1x8x16xf32>
    %14 = vector.shape_cast %13 : vector<1x8x16xf32> to vector<8x16xf32>
    %15 = vector.shape_cast %12 : vector<8x16xf32> to vector<1x8x16xf32>
    tpu.vector_store %arg4[%c0_5, %c0_6, %c0_7], %15 {strides = array<i32>} : memref<1x8x16xf32, #tpu.memory_space<vmem>>, vector<1x8x16xf32>,
    return
  }
  func.func @transform_0(%arg0: i32) -> (i32, i32) {
    %c0_i32 = arith.constant 0 : i32
    %c0_i32_0 = arith.constant 0 : i32
    return %arg0, %c0_i32 : i32, i32
  }
  func.func @transform_1(%arg0: i32) -> (i32, i32) {
    %c0_i32 = arith.constant 0 : i32
    %c0_i32_0 = arith.constant 0 : i32
    %c0_i32_1 = arith.constant 0 : i32
    return %c0_i32, %c0_i32_0 : i32, i32
  }
  func.func @transform_2(%arg0: i32) -> (i32, i32) {
    %c0_i32 = arith.constant 0 : i32
    %c0_i32_0 = arith.constant 0 : i32
    %c0_i32_1 = arith.constant 0 : i32
    return %c0_i32, %c0_i32_0 : i32, i32
  }
  func.func @transform_3(%arg0: i32) -> (i32, i32, i32) {
    %c0_i32 = arith.constant 0 : i32
    %c0_i32_0 = arith.constant 0 : i32
    %c0_i32_1 = arith.constant 0 : i32
    return %arg0, %c0_i32, %c0_i32_0 : i32, i32, i32
  }
}

</mosaic_0001>

<llo_original>
// kernel: up_forward.5
$region0: #{up_forward.5}
  #allocation0 [shape = 'u32[]', space=smem, size = 0x4, offset = 0x4, fixed_abs, tag = 'smem constant byte address 0x4 - core index']
  #allocation1 [shape = 'u32[72,128]{1,0:T(1,128)}', space=vmem, size = 0x9000, scoped, tag = 'internal scratch']
  %s0 = inlined_call_operand.vmem [shape: bf16[48,128], index: 0, kind: input, shape index: {}]
  %s1 = inlined_call_operand.vmem [shape: f32[1,128], index: 1, kind: input, shape index: {}]
  %s2 = inlined_call_operand.vmem [shape: f32[1,128], index: 2, kind: input, shape index: {}]
  %s3 = inlined_call_operand.hbm [shape: f32[2,8,16], index: 3, kind: output, shape index: {}]
  %s4 = sld [smem:[#allocation0]]
  $region45: #{up_forward.5} parent=0
    _
  %s6 = ssub.s32 1, %s4
  %s7 = scalar_select 0, %s6, %s4
  $region1: #{up_forward.5} parent=0
    #allocation2 [shape = 'u8[8192]{0}', space=vmem, size = 0x2000, scoped, tag = 'output window, operand 0']
    #allocation3 [shape = 's32[2]{0}', space=sflag, size = 0x8, scoped, tag = 'scoped memory for up_forward.5']
    %8 = vsyncpa [#allocation3], 0
    %s9 = scalar_lea.sflag [#allocation3], 1
    %10 = vsyncpa %s9, 0
    loop: start=0, step=1, limit=4
    $region2: #{up_forward.5} parent=1 // loop_pre_header
      _
    $region3: #{up_forward.5} parent=1 // loop_header
      %s12 = sphi 0, %s16
      %p13 = scmp.ge.s32.totalorder %s12, 4
      %s22 = sphi 0, %s24
      %s25 = sphi 0, %s22
      %s26 = sphi 0, %s25
      %s42 = sphi 0, %s26
      %s46 = sphi 0, %s46
      %s48 = sphi 0, %s46
      %s49 = sphi 0, %s48
      %s63 = sphi 0, %s49
      %s67 = sphi 0, %s67
      %s69 = sphi 0, %s67
      %s70 = sphi 0, %s69
      %s84 = sphi 0, %s70
      %s90 = sphi 0, %s92
      %s93 = sphi 0, %s90
      %s94 = sphi 0, %s93
      %s110 = sphi 0, %s94
    $region4: #{up_forward.5} parent=1 // loop_header_branch
      %15 = sbr.rel (%p13) target = $region8
    $region5: #{up_forward.5} parent=1 // loop_body
      %s17 = ssub.s32 %s12, 1
      %s18 = ssub.s32 %s12, 2
      %s19 = sadd.s32 %s12, 1
      %s20 = ssub.s32 %s12, %s19
      %p21 = scmp.eq.s32.totalorder %s20, 0
      %s23 = sadd.s32 %s22, 1
      %s24 = scalar_select %p21, %s22, %s23
      %p27 = pneg %p21
      %p28 = scmp.eq.s32.totalorder %s12, 1
      %p29 = por %p27, %p28
      %p30 = scmp.ne.s32.totalorder %s22, %s25
      %p31 = scmp.eq.s32.totalorder %s12, 0
      %p32 = por %p30, %p31
      %p33 = scmp.ne.s32.totalorder %s22, %s25
      %p34 = scmp.eq.s32.totalorder %s17, 1
      %p35 = por %p33, %p34
      %p36 = scmp.ne.s32.totalorder %s25, %s26
      %p37 = scmp.eq.s32.totalorder %s17, 0
      %p38 = por %p36, %p37
      %p39 = scmp.ne.s32.totalorder %s25, %s26
      %p40 = scmp.eq.s32.totalorder %s18, 1
      %p41 = por %p39, %p40
      %p43 = scmp.ne.s32.totalorder %s26, %s42
      %p44 = scmp.eq.s32.totalorder %s18, 0
      %p45 = por %p43, %p44
      %s47 = sadd.s32 %s46, 1
      %p50 = scmp.eq.s32.totalorder %s12, 1
      %p51 = scmp.ne.s32.totalorder %s46, %s48
      %p52 = scmp.eq.s32.totalorder %s12, 0
      %p53 = por %p51, %p52
      %p54 = scmp.ne.s32.totalorder %s46, %s48
      %p55 = scmp.eq.s32.totalorder %s17, 1
      %p56 = por %p54, %p55
      %p57 = scmp.ne.s32.totalorder %s48, %s49
      %p58 = scmp.eq.s32.totalorder %s17, 0
      %p59 = por %p57, %p58
      %p60 = scmp.ne.s32.totalorder %s48, %s49
      %p61 = scmp.eq.s32.totalorder %s18, 1
      %p62 = por %p60, %p61
      %p64 = scmp.ne.s32.totalorder %s49, %s63
      %p65 = scmp.eq.s32.totalorder %s18, 0
      %p66 = por %p64, %p65
      %s68 = sadd.s32 %s67, 1
      %p71 = scmp.eq.s32.totalorder %s12, 1
      %p72 = scmp.ne.s32.totalorder %s67, %s69
      %p73 = scmp.eq.s32.totalorder %s12, 0
      %p74 = por %p72, %p73
      %p75 = scmp.ne.s32.totalorder %s67, %s69
      %p76 = scmp.eq.s32.totalorder %s17, 1
      %p77 = por %p75, %p76
      %p78 = scmp.ne.s32.totalorder %s69, %s70
      %p79 = scmp.eq.s32.totalorder %s17, 0
      %p80 = por %p78, %p79
      %p81 = scmp.ne.s32.totalorder %s69, %s70
      %p82 = scmp.eq.s32.totalorder %s18, 1
      %p83 = por %p81, %p82
      %p85 = scmp.ne.s32.totalorder %s70, %s84
      %p86 = scmp.eq.s32.totalorder %s18, 0
      %p87 = por %p85, %p86
      %s88 = ssub.s32 %s12, %s19
      %p89 = scmp.eq.s32.totalorder %s88, 0
      %s91 = sadd.s32 %s90, 1
      %s92 = scalar_select %p89, %s90, %s91
      %p95 = pneg %p89
      %p96 = scmp.eq.s32.totalorder %s12, 1
      %p97 = por %p95, %p96
      %p98 = scmp.ne.s32.totalorder %s90, %s93
      %p99 = scmp.eq.s32.totalorder %s12, 0
      %p100 = por %p98, %p99
      %p101 = scmp.ne.s32.totalorder %s90, %s93
      %p102 = scmp.eq.s32.totalorder %s17, 1
      %p103 = por %p101, %p102
      %p104 = scmp.ne.s32.totalorder %s93, %s94
      %p105 = scmp.eq.s32.totalorder %s17, 0
      %p106 = por %p104, %p105
      %p107 = scmp.ne.s32.totalorder %s93, %s94
      %p108 = scmp.eq.s32.totalorder %s18, 1
      %p109 = por %p107, %p108
      %p111 = scmp.ne.s32.totalorder %s94, %s110
      %p112 = scmp.eq.s32.totalorder %s18, 0
      %p113 = por %p111, %p112
      %p114 = scmp.le.s32.totalorder 1, %s12
      %p115 = scmp.lt.s32.totalorder %s12, 3
      %p116 = pnand %p114, %p115
      %p117 = pneg %p116
      // Predicated region
      $region9: #{up_forward.5} parent=5 // pred_check
        _
      $region10: #{up_forward.5} parent=5 // pred_check_branch
        %119 = sbr.rel (%p116) target = $region12
      $region11: #{up_forward.5} parent=5 // pred_region
        %s120 = ssub.s32 %s12, 1
        // Predicated region
        $region13: #{up_forward.5} parent=11 // pred_check
          %p121 = pneg %p59
        $region14: #{up_forward.5} parent=11 // pred_check_branch
          %123 = sbr.rel (%p121) target = $region16
        $region15: #{up_forward.5} parent=11 // pred_region
          _
        $region16: #{up_forward.5} parent=11 // pred_fallthru
          _
        // Predicated region
        $region17: #{up_forward.5} parent=11 // pred_check
          %p124 = pneg %p80
        $region18: #{up_forward.5} parent=11 // pred_check_branch
          %126 = sbr.rel (%p124) target = $region20
        $region19: #{up_forward.5} parent=11 // pred_region
          _
        $region20: #{up_forward.5} parent=11 // pred_fallthru
          _
      $region12: #{up_forward.5} parent=5 // pred_fallthru
        _
      %p127 = scmp.lt.s32.totalorder %s12, 2
      // Predicated region
      $region21: #{up_forward.5} parent=5 // pred_check
        %p128 = pneg %p127
      $region22: #{up_forward.5} parent=5 // pred_check_branch
        %130 = sbr.rel (%p128) target = $region24
      $region23: #{up_forward.5} parent=5 // pred_region
        // Predicated region
        $region25: #{up_forward.5} parent=23 // pred_check
          %p131 = pneg %p32
        $region26: #{up_forward.5} parent=23 // pred_check_branch
          %133 = sbr.rel (%p131) target = $region28
        $region27: #{up_forward.5} parent=23 // pred_region
          %s134 = smul.u32 3, %s12
          %p135 = scmp.lt.s32.totalorder %s134, 5
          %s136 = scalar_select %p135, %s134, 5
          %s137 = smul.addr %s136, 4
          %s138 = scalar_lea.vmem %s0, %s137
          %s139 = smul.u32 3, %s12
        $region28: #{up_forward.5} parent=23 // pred_fallthru
          _
      $region24: #{up_forward.5} parent=5 // pred_fallthru
        _
      %p140 = scmp.le.s32.totalorder 1, %s12
      %p141 = scmp.lt.s32.totalorder %s12, 3
      %p142 = pnand %p140, %p141
      %p143 = pneg %p142
      // Predicated region
      $region29: #{up_forward.5} parent=5 // pred_check
        _
      $region30: #{up_forward.5} parent=5 // pred_check_branch
        %145 = sbr.rel (%p142) target = $region32
      $region31: #{up_forward.5} parent=5 // pred_region
        %s146 = ssub.s32 %s12, 1
        %s147 = smul.u32 3, %s17
        %p148 = scmp.lt.s32.totalorder %s147, 5
        %s149 = scalar_select %p148, %s147, 5
        %s150 = smul.addr %s149, 4
        %s151 = scalar_lea.vmem %s0, %s150
        %p152 = pneg %p38
        %p153 = pneg %p35
        %p154 = pneg %p59
        %p155 = pneg %p56
        %p156 = pneg %p80
        %p157 = pneg %p77
        %p158 = pneg %p106
        %p159 = pneg %p103
        %s160 = sand.u32 %s93, 1
        %s161 = scalar_lea.sflag [#allocation3], %s160
        %s162 = sand.u32 %s93, 1
        %s163 = smul.addr %s162, 8
        %s164 = scalar_lea.vmem [#allocation2], %s163
        %s165 = smul.u32 3, %s17
        %p166 = scmp.lt.s32.totalorder %s165, 5
        %s167 = scalar_select %p166, %s165, 5
        %s168 = smul.addr %s167, 4
        %s169 = scalar_lea.vmem %s0, %s168
        %s170 = smul.u32 3, %s17
        %v171 = vld [vmem:[%s169] sm:$0xf]
        %v172 = vld [vmem:[%s169 + $0x4] sm:$0xf]
        %v173 = vld [vmem:[%s169 + $0x8] sm:$0xf]
        %v174 = vunpack.c.l.bf16 %v171
        %v175 = vunpack.c.l.bf16 %v172
        %v176 = vunpack.c.l.bf16 %v173
        %v177 = vld [vmem:[%s1] sm:$0x1]
        %v179 = vperm.slane %v177, 0
        %v181 = vmul.f32 %v174, %v179
        %v182 = vmul.f32 %v175, %v179
        %v183 = vmul.f32 %v176, %v179
        %v184 = vld [vmem:[%s2] sm:$0x1]
        %v186 = vperm.slane %v184, 0
        %v188 = vadd.f32 %v181, %v186
        %v189 = vadd.f32 %v182, %v186
        %v190 = vadd.f32 %v183, %v186
        %v191 = vmax.f32 %v188, 0.0
        %v192 = vmax.f32 %v189, 0.0
        %v193 = vmax.f32 %v190, 0.0
        %vm197 = vcmask 1045504
        %v198 = vrot.slane %v191, 2
        %v199 = vrot.slane %v192, 2
        %v200 = vsel %vm197, %v198, %v199
        %v201 = vrot.slane %v193, 2
        %v202 = vsel %vm197, %v199, %v201
        %205 = vxpose.xlu0.b32.start [1/16] %v200, 128
        %206 = vxpose.xlu0.b32.cont [2/16] %v202, 128
        %207 = vxpose.xlu0.b32.cont [3/16] 0.0, 128
        %208 = vxpose.xlu0.b32.cont [4/16] 0.0, 128
        %209 = vxpose.xlu0.b32.cont [5/16] 0.0, 128
        %210 = vxpose.xlu0.b32.cont [6/16] 0.0, 128
        %211 = vxpose.xlu0.b32.cont [7/16] 0.0, 128
        %212 = vxpose.xlu0.b32.cont [8/16] 0.0, 128
        %213 = vxpose.xlu0.b32.cont [9/16] 0.0, 128
        %214 = vxpose.xlu0.b32.cont [10/16] 0.0, 128
        %215 = vxpose.xlu0.b32.cont [11/16] 0.0, 128
        %216 = vxpose.xlu0.b32.cont [12/16] 0.0, 128
        %217 = vxpose.xlu0.b32.cont [13/16] 0.0, 128
        %218 = vxpose.xlu0.b32.cont [14/16] 0.0, 128
        %219 = vxpose.xlu0.b32.cont [15/16] 0.0, 128
        %220 = vxpose.xlu0.b32.end [16/16] 0.0, 128
        %v221 = vpop.trf.xlu0
        %v222 = vpop.trf.xlu0
        %v223 = vpop.trf.xlu0
        %v224 = vpop.trf.xlu0
        %v225 = vpop.trf.xlu0
        %v226 = vpop.trf.xlu0
        %v227 = vpop.trf.xlu0
        %v228 = vpop.trf.xlu0
        %v229 = vpop.trf.xlu0
        %v230 = vpop.trf.xlu0
        %v231 = vpop.trf.xlu0
        %v232 = vpop.trf.xlu0
        %v233 = vpop.trf.xlu0
        %v234 = vpop.trf.xlu0
        %v235 = vpop.trf.xlu0
        %v236 = vpop.trf.xlu0
        %vm237 = vcmask 130048
        %238 = vst.msk [vmem:[%s164] sm:$0xff] %vm237, %v221
        %s239 = sand.u32 %s93, 1
        %s240 = scalar_lea.sflag [#allocation3], %s239
        %s241 = sand.u32 %s93, 1
        %s242 = smul.addr %s241, 8
        %s243 = scalar_lea.vmem [#allocation2], %s242
        // Predicated region
        $region33: #{up_forward.5} parent=31 // pred_check
          %p244 = pneg %p103
        $region34: #{up_forward.5} parent=31 // pred_check_branch
          %246 = sbr.rel (%p244) target = $region36
        $region35: #{up_forward.5} parent=31 // pred_region
          %248 = vsyncadd %s240, 0
          %s249 = smul.addr %s17, 8
          %s250 = scalar_lea.hbm %s3, %s249
          %s252 = sshll.u32 %s243, 4
          %s253 = int_to_ptr.vmem [resolvable:$true] %s252
          %s254 = sshll.u32 %s250, 4
          %s255 = int_to_ptr.hbm [resolvable:$true] %s254
          %257 = dma.vmem_to_hbm [thread:$0]  %s253, 128, %s255, %s240
        $region36: #{up_forward.5} parent=31 // pred_fallthru
          _
      $region32: #{up_forward.5} parent=5 // pred_fallthru
        _
      %p258 = scmp.le.s32.totalorder 2, %s12
      // Predicated region
      $region37: #{up_forward.5} parent=5 // pred_check
        %p259 = pneg %p258
      $region38: #{up_forward.5} parent=5 // pred_check_branch
        %261 = sbr.rel (%p259) target = $region40
      $region39: #{up_forward.5} parent=5 // pred_region
        %s262 = ssub.s32 %s12, 2
        // Predicated region
        $region41: #{up_forward.5} parent=39 // pred_check
          %p263 = pneg %p109
        $region42: #{up_forward.5} parent=39 // pred_check_branch
          %265 = sbr.rel (%p263) target = $region44
        $region43: #{up_forward.5} parent=39 // pred_region
          %s266 = sand.u32 %s94, 1
          %s267 = scalar_lea.sflag [#allocation3], %s266
          %s268 = sand.u32 %s94, 1
          %s269 = smul.addr %s268, 8
          %s270 = scalar_lea.vmem [#allocation2], %s269
          %272 = dma.done %s267, 128
        $region44: #{up_forward.5} parent=39 // pred_fallthru
          _
      $region40: #{up_forward.5} parent=5 // pred_fallthru
        _
    $region6: #{up_forward.5} parent=1 // loop_footer
      %s16 = sadd.s32 1, %s12
    $region7: #{up_forward.5} parent=1 // loop_footer_branch
      %11 = sbr.rel target = $region3
    $region8: #{up_forward.5} parent=1 // loop_exit
      _
    %273 = vsyncpa [#allocation3], 1
    %s274 = scalar_lea.sflag [#allocation3], 1
    %275 = vsyncpa %s274, 1

// kernel: up_forward.3
$region0: #{up_forward.3}
  #allocation0 [shape = 'u32[]', space=smem, size = 0x4, offset = 0x4, fixed_abs, tag = 'smem constant byte address 0x4 - core index']
  #allocation1 [shape = 'u32[72,128]{1,0:T(1,128)}', space=vmem, size = 0x9000, scoped, tag = 'internal scratch']
  %s0 = inlined_call_operand.vmem [shape: bf16[48,128], index: 0, kind: input, shape index: {}]
  %s1 = inlined_call_operand.vmem [shape: bf16[5,128,128], index: 1, kind: input, shape index: {}]
  %s2 = inlined_call_operand.vmem [shape: bf16[48,128], index: 2, kind: output, shape index: {0}]
  %s3 = inlined_call_operand.vmem [shape: f32[2,2,128], index: 3, kind: output, shape index: {1}]
  %4 = xla_tuple %s2, %s3
  %s5 = sld [smem:[#allocation0]]
  $region49: #{up_forward.3} parent=0
    _
  %s7 = ssub.s32 1, %s5
  %s8 = scalar_select 0, %s7, %s5
  loop: start=0, step=1, limit=4
  $region2: #{up_forward.3} parent=0 // loop_pre_header
    _
  $region3: #{up_forward.3} parent=0 // loop_header
    %s10 = sphi 0, %s14
    %p11 = scmp.ge.s32.totalorder %s10, 4
    %s20 = sphi 0, %s22
    %s23 = sphi 0, %s20
    %s24 = sphi 0, %s23
    %s40 = sphi 0, %s24
    %s44 = sphi 0, %s44
    %s46 = sphi 0, %s44
    %s47 = sphi 0, %s46
    %s61 = sphi 0, %s47
    %s67 = sphi 0, %s69
    %s70 = sphi 0, %s67
    %s71 = sphi 0, %s70
    %s87 = sphi 0, %s71
    %s93 = sphi 0, %s95
    %s96 = sphi 0, %s93
    %s97 = sphi 0, %s96
    %s113 = sphi 0, %s97
  $region4: #{up_forward.3} parent=0 // loop_header_branch
    %13 = sbr.rel (%p11) target = $region8
  $region5: #{up_forward.3} parent=0 // loop_body
    %s15 = ssub.s32 %s10, 1
    %s16 = ssub.s32 %s10, 2
    %s17 = sadd.s32 %s10, 1
    %s18 = ssub.s32 %s10, %s17
    %p19 = scmp.eq.s32.totalorder %s18, 0
    %s21 = sadd.s32 %s20, 1
    %s22 = scalar_select %p19, %s20, %s21
    %p25 = pneg %p19
    %p26 = scmp.eq.s32.totalorder %s10, 1
    %p27 = por %p25, %p26
    %p28 = scmp.ne.s32.totalorder %s20, %s23
    %p29 = scmp.eq.s32.totalorder %s10, 0
    %p30 = por %p28, %p29
    %p31 = scmp.ne.s32.totalorder %s20, %s23
    %p32 = scmp.eq.s32.totalorder %s15, 1
    %p33 = por %p31, %p32
    %p34 = scmp.ne.s32.totalorder %s23, %s24
    %p35 = scmp.eq.s32.totalorder %s15, 0
    %p36 = por %p34, %p35
    %p37 = scmp.ne.s32.totalorder %s23, %s24
    %p38 = scmp.eq.s32.totalorder %s16, 1
    %p39 = por %p37, %p38
    %p41 = scmp.ne.s32.totalorder %s24, %s40
    %p42 = scmp.eq.s32.totalorder %s16, 0
    %p43 = por %p41, %p42
    %s45 = sadd.s32 %s44, 1
    %p48 = scmp.eq.s32.totalorder %s10, 1
    %p49 = scmp.ne.s32.totalorder %s44, %s46
    %p50 = scmp.eq.s32.totalorder %s10, 0
    %p51 = por %p49, %p50
    %p52 = scmp.ne.s32.totalorder %s44, %s46
    %p53 = scmp.eq.s32.totalorder %s15, 1
    %p54 = por %p52, %p53
    %p55 = scmp.ne.s32.totalorder %s46, %s47
    %p56 = scmp.eq.s32.totalorder %s15, 0
    %p57 = por %p55, %p56
    %p58 = scmp.ne.s32.totalorder %s46, %s47
    %p59 = scmp.eq.s32.totalorder %s16, 1
    %p60 = por %p58, %p59
    %p62 = scmp.ne.s32.totalorder %s47, %s61
    %p63 = scmp.eq.s32.totalorder %s16, 0
    %p64 = por %p62, %p63
    %s65 = ssub.s32 %s10, %s17
    %p66 = scmp.eq.s32.totalorder %s65, 0
    %s68 = sadd.s32 %s67, 1
    %s69 = scalar_select %p66, %s67, %s68
    %p72 = pneg %p66
    %p73 = scmp.eq.s32.totalorder %s10, 1
    %p74 = por %p72, %p73
    %p75 = scmp.ne.s32.totalorder %s67, %s70
    %p76 = scmp.eq.s32.totalorder %s10, 0
    %p77 = por %p75, %p76
    %p78 = scmp.ne.s32.totalorder %s67, %s70
    %p79 = scmp.eq.s32.totalorder %s15, 1
    %p80 = por %p78, %p79
    %p81 = scmp.ne.s32.totalorder %s70, %s71
    %p82 = scmp.eq.s32.totalorder %s15, 0
    %p83 = por %p81, %p82
    %p84 = scmp.ne.s32.totalorder %s70, %s71
    %p85 = scmp.eq.s32.totalorder %s16, 1
    %p86 = por %p84, %p85
    %p88 = scmp.ne.s32.totalorder %s71, %s87
    %p89 = scmp.eq.s32.totalorder %s16, 0
    %p90 = por %p88, %p89
    %s91 = ssub.s32 %s10, %s17
    %p92 = scmp.eq.s32.totalorder %s91, 0
    %s94 = sadd.s32 %s93, 1
    %s95 = scalar_select %p92, %s93, %s94
    %p98 = pneg %p92
    %p99 = scmp.eq.s32.totalorder %s10, 1
    %p100 = por %p98, %p99
    %p101 = scmp.ne.s32.totalorder %s93, %s96
    %p102 = scmp.eq.s32.totalorder %s10, 0
    %p103 = por %p101, %p102
    %p104 = scmp.ne.s32.totalorder %s93, %s96
    %p105 = scmp.eq.s32.totalorder %s15, 1
    %p106 = por %p104, %p105
    %p107 = scmp.ne.s32.totalorder %s96, %s97
    %p108 = scmp.eq.s32.totalorder %s15, 0
    %p109 = por %p107, %p108
    %p110 = scmp.ne.s32.totalorder %s96, %s97
    %p111 = scmp.eq.s32.totalorder %s16, 1
    %p112 = por %p110, %p111
    %p114 = scmp.ne.s32.totalorder %s97, %s113
    %p115 = scmp.eq.s32.totalorder %s16, 0
    %p116 = por %p114, %p115
    %p117 = scmp.le.s32.totalorder 1, %s10
    %p118 = scmp.lt.s32.totalorder %s10, 3
    %p119 = pnand %p117, %p118
    %p120 = pneg %p119
    // Predicated region
    $region9: #{up_forward.3} parent=5 // pred_check
      _
    $region10: #{up_forward.3} parent=5 // pred_check_branch
      %122 = sbr.rel (%p119) target = $region12
    $region11: #{up_forward.3} parent=5 // pred_region
      %s123 = ssub.s32 %s10, 1
      // Predicated region
      $region13: #{up_forward.3} parent=11 // pred_check
        %p124 = pneg %p57
      $region14: #{up_forward.3} parent=11 // pred_check_branch
        %126 = sbr.rel (%p124) target = $region16
      $region15: #{up_forward.3} parent=11 // pred_region
        _
      $region16: #{up_forward.3} parent=11 // pred_fallthru
        _
    $region12: #{up_forward.3} parent=5 // pred_fallthru
      _
    %p127 = scmp.lt.s32.totalorder %s10, 2
    // Predicated region
    $region17: #{up_forward.3} parent=5 // pred_check
      %p128 = pneg %p127
    $region18: #{up_forward.3} parent=5 // pred_check_branch
      %130 = sbr.rel (%p128) target = $region20
    $region19: #{up_forward.3} parent=5 // pred_region
      // Predicated region
      $region21: #{up_forward.3} parent=19 // pred_check
        %p131 = pneg %p30
      $region22: #{up_forward.3} parent=19 // pred_check_branch
        %133 = sbr.rel (%p131) target = $region24
      $region23: #{up_forward.3} parent=19 // pred_region
        %s134 = smul.u32 3, %s10
        %p135 = scmp.lt.s32.totalorder %s134, 5
        %s136 = scalar_select %p135, %s134, 5
        %s137 = smul.addr %s136, 4
        %s138 = scalar_lea.vmem %s0, %s137
        %s139 = smul.u32 3, %s10
      $region24: #{up_forward.3} parent=19 // pred_fallthru
        _
    $region20: #{up_forward.3} parent=5 // pred_fallthru
      _
    %p140 = scmp.le.s32.totalorder 1, %s10
    %p141 = scmp.lt.s32.totalorder %s10, 3
    %p142 = pnand %p140, %p141
    %p143 = pneg %p142
    // Predicated region
    $region25: #{up_forward.3} parent=5 // pred_check
      _
    $region26: #{up_forward.3} parent=5 // pred_check_branch
      %145 = sbr.rel (%p142) target = $region28
    $region27: #{up_forward.3} parent=5 // pred_region
      %s146 = ssub.s32 %s10, 1
      %s147 = smul.u32 3, %s15
      %p148 = scmp.lt.s32.totalorder %s147, 5
      %s149 = scalar_select %p148, %s147, 5
      %s150 = smul.addr %s149, 4
      %s151 = scalar_lea.vmem %s0, %s150
      %p152 = pneg %p36
      %p153 = pneg %p33
      %p154 = pneg %p57
      %p155 = pneg %p54
      %p156 = pneg %p83
      %p157 = pneg %p80
      %s158 = smul.u32 3, %s15
      %p159 = scmp.lt.s32.totalorder %s158, 5
      %s160 = scalar_select %p159, %s158, 5
      %s161 = smul.addr %s160, 4
      %s162 = scalar_lea.vmem %s2, %s161
      %p163 = pneg %p109
      %p164 = pneg %p106
      %p165 = scmp.lt.s32.totalorder %s15, 1
      %s166 = scalar_select %p165, %s15, 1
      %s167 = smul.addr %s166, 2
      %s168 = scalar_lea.vmem %s3, %s167
      %s169 = smul.u32 3, %s15
      %p170 = scmp.lt.s32.totalorder %s169, 5
      %s171 = scalar_select %p170, %s169, 5
      %s172 = smul.addr %s171, 4
      %s173 = scalar_lea.vmem %s0, %s172
      %s174 = smul.u32 3, %s15
      %s175 = smul.u32 3, %s15
      %p176 = scmp.lt.s32.totalorder %s175, 5
      %s177 = scalar_select %p176, %s175, 5
      %s178 = smul.addr %s177, 4
      %s179 = scalar_lea.vmem %s2, %s178
      %s180 = smul.u32 3, %s15
      %p181 = scmp.lt.s32.totalorder %s15, 1
      %s182 = scalar_select %p181, %s15, 1
      %s183 = smul.addr %s182, 2
      %s184 = scalar_lea.vmem %s3, %s183
      %v186 = vlaneseq
      %v187 = vshrl.u32 %v186, 7
      %v188 = vadd.s32 %v187, 8
      %v189 = vadd.s32 %v187, 16
      %vm190 = vcmp.ge.s32.totalorder %v187, 2
      %vm191 = vcmp.ge.s32.totalorder %v188, 2
      %vm192 = vcmp.ge.s32.totalorder %v189, 2
      %vm193 = vcmp.lt.s32.totalorder %v187, 18
      %vm194 = vcmp.lt.s32.totalorder %v188, 18
      %vm195 = vcmp.lt.s32.totalorder %v189, 18
      %vm196 = vmand %vm190, %vm193
      %vm197 = vmand %vm191, %vm194
      %vm198 = vmand %vm192, %vm195
      %v199 = vld [vmem:[%s173] sm:$0xf]
      %v200 = vld [vmem:[%s173 + $0x4] sm:$0xf]
      %v201 = vld [vmem:[%s173 + $0x8] sm:$0xf]
      %v205 = vunpack.c.l.b16 %v199
      %v206 = vunpack.c.l.b16 %v200
      %v207 = vunpack.c.l.b16 %v201
      %v208 = vpack.c.b16 %v206, %v205
      %v209 = vpack.c.b16 %v207, %v207
      %vm210 = vcmask 1040384
      %v211 = vrot.slane %v208, 7
      %v212 = vrot.slane %v209, 7
      %v213 = vsel %vm210, %v211, %v212
      %vm214 = vcmask 1040384
      %v217 = vsel %vm214, 0, %v211
      %vm219 = vcmask 1044480
      %v221 = vsel %vm219, %v213, 0
      %v223 = vld [vmem:[%s1] sm:$0xf]
      %v224 = vld [vmem:[%s1 + $0x4] sm:$0xf]
      %v225 = vld [vmem:[%s1 + $0x8] sm:$0xf]
      %v226 = vld [vmem:[%s1 + $0xc] sm:$0xf]
      %v227 = vld [vmem:[%s1 + $0x10] sm:$0xf]
      %v228 = vld [vmem:[%s1 + $0x14] sm:$0xf]
      %v229 = vld [vmem:[%s1 + $0x18] sm:$0xf]
      %v230 = vld [vmem:[%s1 + $0x1c] sm:$0xf]
      %v231 = vld [vmem:[%s1 + $0x20] sm:$0xf]
      %v232 = vld [vmem:[%s1 + $0x24] sm:$0xf]
      %v233 = vld [vmem:[%s1 + $0x28] sm:$0xf]
      %v234 = vld [vmem:[%s1 + $0x2c] sm:$0xf]
      %v235 = vld [vmem:[%s1 + $0x30] sm:$0xf]
      %v236 = vld [vmem:[%s1 + $0x34] sm:$0xf]
      %v237 = vld [vmem:[%s1 + $0x38] sm:$0xf]
      %v238 = vld [vmem:[%s1 + $0x3c] sm:$0xf]
      %s239 = scalar_lea.vmem %s1, 64
      %v240 = vld [vmem:[%s239] sm:$0xf]
      %v241 = vld [vmem:[%s239 + $0x4] sm:$0xf]
      %v242 = vld [vmem:[%s239 + $0x8] sm:$0xf]
      %v243 = vld [vmem:[%s239 + $0xc] sm:$0xf]
      %v244 = vld [vmem:[%s239 + $0x10] sm:$0xf]
      %v245 = vld [vmem:[%s239 + $0x14] sm:$0xf]
      %v246 = vld [vmem:[%s239 + $0x18] sm:$0xf]
      %v247 = vld [vmem:[%s239 + $0x1c] sm:$0xf]
      %v248 = vld [vmem:[%s239 + $0x20] sm:$0xf]
      %v249 = vld [vmem:[%s239 + $0x24] sm:$0xf]
      %v250 = vld [vmem:[%s239 + $0x28] sm:$0xf]
      %v251 = vld [vmem:[%s239 + $0x2c] sm:$0xf]
      %v252 = vld [vmem:[%s239 + $0x30] sm:$0xf]
      %v253 = vld [vmem:[%s239 + $0x34] sm:$0xf]
      %v254 = vld [vmem:[%s239 + $0x38] sm:$0xf]
      %v255 = vld [vmem:[%s239 + $0x3c] sm:$0xf]
      %vm256 = vsmask.f32 7424
      %v257 = vshrl.u32 %v217, 16
      %v259 = vshll.u32 %v217, 16
      %v261 = vrot.slane %v259, 1
      %v262 = vor.u32 %v257, %v261
      %v263 = vshll.u32 %v221, 16
      %v265 = vrot.slane %v263, 1
      %v266 = vsel %vm256, %v262, %v265
      %v267 = vshrl.u32 %v221, 16
      %v269 = vor.u32 %v267, %v265
      %v288 = vunpack.c.l.b16 %v240
      %v289 = vunpack.c.l.b16 %v241
      %v290 = vunpack.c.l.b16 %v242
      %v291 = vunpack.c.l.b16 %v243
      %v292 = vunpack.c.l.b16 %v244
      %v293 = vunpack.c.l.b16 %v245
      %v294 = vunpack.c.l.b16 %v246
      %v295 = vunpack.c.l.b16 %v247
      %v296 = vunpack.c.l.b16 %v248
      %v297 = vunpack.c.l.b16 %v249
      %v298 = vunpack.c.l.b16 %v250
      %v299 = vunpack.c.l.b16 %v251
      %v300 = vunpack.c.l.b16 %v252
      %v301 = vunpack.c.l.b16 %v253
      %v302 = vunpack.c.l.b16 %v254
      %v303 = vunpack.c.l.b16 %v255
      %v304 = vpack.c.b16 %v289, %v288
      %v305 = vpack.c.b16 %v291, %v290
      %v306 = vpack.c.b16 %v293, %v292
      %v307 = vpack.c.b16 %v295, %v294
      %v308 = vpack.c.b16 %v297, %v296
      %v309 = vpack.c.b16 %v299, %v298
      %v310 = vpack.c.b16 %v301, %v300
      %v311 = vpack.c.b16 %v303, %v302
      %320 = vmatpush.bf16.msra.mxu0 %v311
      %321 = vmatpush.bf16.msra.mxu0 %v310
      %322 = vmatpush.bf16.msra.mxu0 %v309
      %323 = vmatpush.bf16.msra.mxu0 %v308
      %324 = vmatpush.bf16.msra.mxu0 %v307
      %325 = vmatpush.bf16.msra.mxu0 %v306
      %326 = vmatpush.bf16.msra.mxu0 %v305
      %327 = vmatpush.bf16.msra.mxu0 %v304
      %328 = vmatmul.bf16.gmra.mxu0 %v266
      %v329 = vpop.f32.mrf.mxu0
      %v330 = vadd.f32 0.0, %v329
      %v331 = vpop.f32.mrf.mxu0
      %v332 = vadd.f32 0.0, %v331
      %333 = vmatmul.bf16.gmra.mxu0 %v269
      %v334 = vpop.f32.mrf.mxu0
      %v335 = vadd.f32 0.0, %v334
      %v336 = vpop.f32.mrf.mxu0
      %337 = vdwg.mxu0
      %v354 = vunpack.c.l.b16 %v223
      %v355 = vunpack.c.l.b16 %v224
      %v356 = vunpack.c.l.b16 %v225
      %v357 = vunpack.c.l.b16 %v226
      %v358 = vunpack.c.l.b16 %v227
      %v359 = vunpack.c.l.b16 %v228
      %v360 = vunpack.c.l.b16 %v229
      %v361 = vunpack.c.l.b16 %v230
      %v362 = vunpack.c.l.b16 %v231
      %v363 = vunpack.c.l.b16 %v232
      %v364 = vunpack.c.l.b16 %v233
      %v365 = vunpack.c.l.b16 %v234
      %v366 = vunpack.c.l.b16 %v235
      %v367 = vunpack.c.l.b16 %v236
      %v368 = vunpack.c.l.b16 %v237
      %v369 = vunpack.c.l.b16 %v238
      %v370 = vpack.c.b16 %v355, %v354
      %v371 = vpack.c.b16 %v357, %v356
      %v372 = vpack.c.b16 %v359, %v358
      %v373 = vpack.c.b16 %v361, %v360
      %v374 = vpack.c.b16 %v363, %v362
      %v375 = vpack.c.b16 %v365, %v364
      %v376 = vpack.c.b16 %v367, %v366
      %v377 = vpack.c.b16 %v369, %v368
      %386 = vmatpush.bf16.msra.mxu0 %v377
      %387 = vmatpush.bf16.msra.mxu0 %v376
      %388 = vmatpush.bf16.msra.mxu0 %v375
      %389 = vmatpush.bf16.msra.mxu0 %v374
      %390 = vmatpush.bf16.msra.mxu0 %v373
      %391 = vmatpush.bf16.msra.mxu0 %v372
      %392 = vmatpush.bf16.msra.mxu0 %v371
      %393 = vmatpush.bf16.msra.mxu0 %v370
      %394 = vmatmul.bf16.gmra.mxu0 %v217
      %v395 = vpop.f32.mrf.mxu0
      %v396 = vadd.f32 %v330, %v395
      %v397 = vpop.f32.mrf.mxu0
      %v398 = vadd.f32 %v332, %v397
      %399 = vmatmul.bf16.gmra.mxu0 %v221
      %v400 = vpop.f32.mrf.mxu0
      %v401 = vadd.f32 %v335, %v400
      %v402 = vpop.f32.mrf.mxu0
      %403 = vdwg.mxu0
      %s404 = scalar_lea.vmem %s1, 128
      %v405 = vld [vmem:[%s404] sm:$0xf]
      %v406 = vld [vmem:[%s404 + $0x4] sm:$0xf]
      %v407 = vld [vmem:[%s404 + $0x8] sm:$0xf]
      %v408 = vld [vmem:[%s404 + $0xc] sm:$0xf]
      %v409 = vld [vmem:[%s404 + $0x10] sm:$0xf]
      %v410 = vld [vmem:[%s404 + $0x14] sm:$0xf]
      %v411 = vld [vmem:[%s404 + $0x18] sm:$0xf]
      %v412 = vld [vmem:[%s404 + $0x1c] sm:$0xf]
      %v413 = vld [vmem:[%s404 + $0x20] sm:$0xf]
      %v414 = vld [vmem:[%s404 + $0x24] sm:$0xf]
      %v415 = vld [vmem:[%s404 + $0x28] sm:$0xf]
      %v416 = vld [vmem:[%s404 + $0x2c] sm:$0xf]
      %v417 = vld [vmem:[%s404 + $0x30] sm:$0xf]
      %v418 = vld [vmem:[%s404 + $0x34] sm:$0xf]
      %v419 = vld [vmem:[%s404 + $0x38] sm:$0xf]
      %v420 = vld [vmem:[%s404 + $0x3c] sm:$0xf]
      %vm423 = vcmask 1046528
      %v424 = vrot.slane %v217, 1
      %v425 = vrot.slane %v221, 1
      %v426 = vsel %vm423, %v424, %v425
      %v445 = vunpack.c.l.b16 %v405
      %v446 = vunpack.c.l.b16 %v406
      %v447 = vunpack.c.l.b16 %v407
      %v448 = vunpack.c.l.b16 %v408
      %v449 = vunpack.c.l.b16 %v409
      %v450 = vunpack.c.l.b16 %v410
      %v451 = vunpack.c.l.b16 %v411
      %v452 = vunpack.c.l.b16 %v412
      %v453 = vunpack.c.l.b16 %v413
      %v454 = vunpack.c.l.b16 %v414
      %v455 = vunpack.c.l.b16 %v415
      %v456 = vunpack.c.l.b16 %v416
      %v457 = vunpack.c.l.b16 %v417
      %v458 = vunpack.c.l.b16 %v418
      %v459 = vunpack.c.l.b16 %v419
      %v460 = vunpack.c.l.b16 %v420
      %v461 = vpack.c.b16 %v446, %v445
      %v462 = vpack.c.b16 %v448, %v447
      %v463 = vpack.c.b16 %v450, %v449
      %v464 = vpack.c.b16 %v452, %v451
      %v465 = vpack.c.b16 %v454, %v453
      %v466 = vpack.c.b16 %v456, %v455
      %v467 = vpack.c.b16 %v458, %v457
      %v468 = vpack.c.b16 %v460, %v459
      %477 = vmatpush.bf16.msra.mxu0 %v468
      %478 = vmatpush.bf16.msra.mxu0 %v467
      %479 = vmatpush.bf16.msra.mxu0 %v466
      %480 = vmatpush.bf16.msra.mxu0 %v465
      %481 = vmatpush.bf16.msra.mxu0 %v464
      %482 = vmatpush.bf16.msra.mxu0 %v463
      %483 = vmatpush.bf16.msra.mxu0 %v462
      %484 = vmatpush.bf16.msra.mxu0 %v461
      %485 = vmatmul.bf16.gmra.mxu0 %v426
      %v486 = vpop.f32.mrf.mxu0
      %v487 = vadd.f32 0.0, %v486
      %v488 = vpop.f32.mrf.mxu0
      %v489 = vadd.f32 0.0, %v488
      %490 = vmatmul.bf16.gmra.mxu0 %v425
      %v491 = vpop.f32.mrf.mxu0
      %v492 = vadd.f32 0.0, %v491
      %v493 = vpop.f32.mrf.mxu0
      %494 = vdwg.mxu0
      %v495 = vadd.f32 %v396, %v487
      %v496 = vadd.f32 %v398, %v489
      %v497 = vadd.f32 %v401, %v492
      %s498 = scalar_lea.vmem %s1, 192
      %v499 = vld [vmem:[%s498] sm:$0xf]
      %v500 = vld [vmem:[%s498 + $0x4] sm:$0xf]
      %v501 = vld [vmem:[%s498 + $0x8] sm:$0xf]
      %v502 = vld [vmem:[%s498 + $0xc] sm:$0xf]
      %v503 = vld [vmem:[%s498 + $0x10] sm:$0xf]
      %v504 = vld [vmem:[%s498 + $0x14] sm:$0xf]
      %v505 = vld [vmem:[%s498 + $0x18] sm:$0xf]
      %v506 = vld [vmem:[%s498 + $0x1c] sm:$0xf]
      %v507 = vld [vmem:[%s498 + $0x20] sm:$0xf]
      %v508 = vld [vmem:[%s498 + $0x24] sm:$0xf]
      %v509 = vld [vmem:[%s498 + $0x28] sm:$0xf]
      %v510 = vld [vmem:[%s498 + $0x2c] sm:$0xf]
      %v511 = vld [vmem:[%s498 + $0x30] sm:$0xf]
      %v512 = vld [vmem:[%s498 + $0x34] sm:$0xf]
      %v513 = vld [vmem:[%s498 + $0x38] sm:$0xf]
      %v514 = vld [vmem:[%s498 + $0x3c] sm:$0xf]
      %vm515 = vsmask.f32 6400
      %v516 = vrot.slane %v257, 1
      %v517 = vrot.slane %v259, 2
      %v518 = vor.u32 %v516, %v517
      %v519 = vrot.slane %v267, 1
      %v520 = vrot.slane %v263, 2
      %v521 = vor.u32 %v519, %v520
      %v522 = vsel %vm515, %v518, %v521
      %v541 = vunpack.c.l.b16 %v499
      %v542 = vunpack.c.l.b16 %v500
      %v543 = vunpack.c.l.b16 %v501
      %v544 = vunpack.c.l.b16 %v502
      %v545 = vunpack.c.l.b16 %v503
      %v546 = vunpack.c.l.b16 %v504
      %v547 = vunpack.c.l.b16 %v505
      %v548 = vunpack.c.l.b16 %v506
      %v549 = vunpack.c.l.b16 %v507
      %v550 = vunpack.c.l.b16 %v508
      %v551 = vunpack.c.l.b16 %v509
      %v552 = vunpack.c.l.b16 %v510
      %v553 = vunpack.c.l.b16 %v511
      %v554 = vunpack.c.l.b16 %v512
      %v555 = vunpack.c.l.b16 %v513
      %v556 = vunpack.c.l.b16 %v514
      %v557 = vpack.c.b16 %v542, %v541
      %v558 = vpack.c.b16 %v544, %v543
      %v559 = vpack.c.b16 %v546, %v545
      %v560 = vpack.c.b16 %v548, %v547
      %v561 = vpack.c.b16 %v550, %v549
      %v562 = vpack.c.b16 %v552, %v551
      %v563 = vpack.c.b16 %v554, %v553
      %v564 = vpack.c.b16 %v556, %v555
      %573 = vmatpush.bf16.msra.mxu0 %v564
      %574 = vmatpush.bf16.msra.mxu0 %v563
      %575 = vmatpush.bf16.msra.mxu0 %v562
      %576 = vmatpush.bf16.msra.mxu0 %v561
      %577 = vmatpush.bf16.msra.mxu0 %v560
      %578 = vmatpush.bf16.msra.mxu0 %v559
      %579 = vmatpush.bf16.msra.mxu0 %v558
      %580 = vmatpush.bf16.msra.mxu0 %v557
      %581 = vmatmul.bf16.gmra.mxu0 %v522
      %v582 = vpop.f32.mrf.mxu0
      %v583 = vadd.f32 0.0, %v582
      %v584 = vpop.f32.mrf.mxu0
      %v585 = vadd.f32 0.0, %v584
      %586 = vmatmul.bf16.gmra.mxu0 %v521
      %v587 = vpop.f32.mrf.mxu0
      %v588 = vadd.f32 0.0, %v587
      %v589 = vpop.f32.mrf.mxu0
      %590 = vdwg.mxu0
      %v591 = vadd.f32 %v495, %v583
      %v592 = vadd.f32 %v496, %v585
      %v593 = vadd.f32 %v497, %v588
      %s594 = scalar_lea.vmem %s1, 256
      %v595 = vld [vmem:[%s594] sm:$0xf]
      %v596 = vld [vmem:[%s594 + $0x4] sm:$0xf]
      %v597 = vld [vmem:[%s594 + $0x8] sm:$0xf]
      %v598 = vld [vmem:[%s594 + $0xc] sm:$0xf]
      %v599 = vld [vmem:[%s594 + $0x10] sm:$0xf]
      %v600 = vld [vmem:[%s594 + $0x14] sm:$0xf]
      %v601 = vld [vmem:[%s594 + $0x18] sm:$0xf]
      %v602 = vld [vmem:[%s594 + $0x1c] sm:$0xf]
      %v603 = vld [vmem:[%s594 + $0x20] sm:$0xf]
      %v604 = vld [vmem:[%s594 + $0x24] sm:$0xf]
      %v605 = vld [vmem:[%s594 + $0x28] sm:$0xf]
      %v606 = vld [vmem:[%s594 + $0x2c] sm:$0xf]
      %v607 = vld [vmem:[%s594 + $0x30] sm:$0xf]
      %v608 = vld [vmem:[%s594 + $0x34] sm:$0xf]
      %v609 = vld [vmem:[%s594 + $0x38] sm:$0xf]
      %v610 = vld [vmem:[%s594 + $0x3c] sm:$0xf]
      %vm611 = vcmask 1045504
      %v612 = vrot.slane %v217, 2
      %v613 = vrot.slane %v221, 2
      %v614 = vsel %vm611, %v612, %v613
      %v633 = vunpack.c.l.b16 %v595
      %v634 = vunpack.c.l.b16 %v596
      %v635 = vunpack.c.l.b16 %v597
      %v636 = vunpack.c.l.b16 %v598
      %v637 = vunpack.c.l.b16 %v599
      %v638 = vunpack.c.l.b16 %v600
      %v639 = vunpack.c.l.b16 %v601
      %v640 = vunpack.c.l.b16 %v602
      %v641 = vunpack.c.l.b16 %v603
      %v642 = vunpack.c.l.b16 %v604
      %v643 = vunpack.c.l.b16 %v605
      %v644 = vunpack.c.l.b16 %v606
      %v645 = vunpack.c.l.b16 %v607
      %v646 = vunpack.c.l.b16 %v608
      %v647 = vunpack.c.l.b16 %v609
      %v648 = vunpack.c.l.b16 %v610
      %v649 = vpack.c.b16 %v634, %v633
      %v650 = vpack.c.b16 %v636, %v635
      %v651 = vpack.c.b16 %v638, %v637
      %v652 = vpack.c.b16 %v640, %v639
      %v653 = vpack.c.b16 %v642, %v641
      %v654 = vpack.c.b16 %v644, %v643
      %v655 = vpack.c.b16 %v646, %v645
      %v656 = vpack.c.b16 %v648, %v647
      %665 = vmatpush.bf16.msra.mxu0 %v656
      %666 = vmatpush.bf16.msra.mxu0 %v655
      %667 = vmatpush.bf16.msra.mxu0 %v654
      %668 = vmatpush.bf16.msra.mxu0 %v653
      %669 = vmatpush.bf16.msra.mxu0 %v652
      %670 = vmatpush.bf16.msra.mxu0 %v651
      %671 = vmatpush.bf16.msra.mxu0 %v650
      %672 = vmatpush.bf16.msra.mxu0 %v649
      %673 = vmatmul.bf16.gmra.mxu0 %v614
      %v674 = vpop.f32.mrf.mxu0
      %v675 = vadd.f32 0.0, %v674
      %v676 = vpop.f32.mrf.mxu0
      %v677 = vadd.f32 0.0, %v676
      %678 = vmatmul.bf16.gmra.mxu0 %v613
      %v679 = vpop.f32.mrf.mxu0
      %v680 = vadd.f32 0.0, %v679
      %v681 = vpop.f32.mrf.mxu0
      %682 = vdwg.mxu0
      %v683 = vadd.f32 %v591, %v675
      %v684 = vadd.f32 %v592, %v677
      %v685 = vadd.f32 %v593, %v680
      %v686 = vsel %vm196, 1, 0
      %v687 = vsel %vm197, 1, 0
      %v688 = vsel %vm198, 1, 0
      %vm689 = vcmp.eq.s32.totalorder %v686, 1
      %vm690 = vcmp.eq.s32.totalorder %v687, 1
      %vm691 = vcmp.eq.s32.totalorder %v688, 1
      %v692 = vsel %vm689, %v683, 0.0
      %v693 = vsel %vm690, %v684, 0.0
      %v694 = vsel %vm691, %v685, 0.0
      %v695 = vpack.c.bf16 %v692, %v692
      %v696 = vpack.c.bf16 %v693, %v693
      %v697 = vpack.c.bf16 %v694, %v694
      %698 = vst [vmem:[%s179] sm:$0xf] %v695
      %699 = vst [vmem:[%s179 + $0x4] sm:$0xf] %v696
      %700 = vst [vmem:[%s179 + $0x8] sm:$0xf] %v697
      %v701 = vadd.f32 %v692, %v693
      %v702 = vadd.f32 %v701, %v694
      %v703 = vrot.slane %v702, 4
      %v704 = vadd.f32 %v702, %v703
      %v705 = vrot.slane %v704, 2
      %v706 = vadd.f32 %v704, %v705
      %v707 = vrot.slane %v706, 1
      %v708 = vadd.f32 %v706, %v707
      %v709 = vmul.f32 %v692, %v692
      %v710 = vmul.f32 %v693, %v693
      %v711 = vmul.f32 %v694, %v694
      %v712 = vadd.f32 %v709, %v710
      %v713 = vadd.f32 %v712, %v711
      %v714 = vrot.slane %v713, 4
      %v715 = vadd.f32 %v713, %v714
      %v716 = vrot.slane %v715, 2
      %v717 = vadd.f32 %v715, %v716
      %v718 = vrot.slane %v717, 1
      %v719 = vadd.f32 %v717, %v718
      %v720 = vsel %vm214, %v708, %v719
      %721 = vst [vmem:[%s184] sm:$0x3] %v720
      %s722 = smul.u32 3, %s15
      %p723 = scmp.lt.s32.totalorder %s722, 5
      %s724 = scalar_select %p723, %s722, 5
      %s725 = smul.addr %s724, 4
      %s726 = scalar_lea.vmem %s2, %s725
      %p727 = scmp.lt.s32.totalorder %s15, 1
      %s728 = scalar_select %p727, %s15, 1
      %s729 = smul.addr %s728, 2
      %s730 = scalar_lea.vmem %s3, %s729
      // Predicated region
      $region29: #{up_forward.3} parent=27 // pred_check
        %p731 = pneg %p80
      $region30: #{up_forward.3} parent=27 // pred_check_branch
        %733 = sbr.rel (%p731) target = $region32
      $region31: #{up_forward.3} parent=27 // pred_region
        %s734 = smul.u32 3, %s15
      $region32: #{up_forward.3} parent=27 // pred_fallthru
        _
      // Predicated region
      $region33: #{up_forward.3} parent=27 // pred_check
        %p735 = pneg %p106
      $region34: #{up_forward.3} parent=27 // pred_check_branch
        %737 = sbr.rel (%p735) target = $region36
      $region35: #{up_forward.3} parent=27 // pred_region
        _
      $region36: #{up_forward.3} parent=27 // pred_fallthru
        _
    $region28: #{up_forward.3} parent=5 // pred_fallthru
      _
    %p738 = scmp.le.s32.totalorder 2, %s10
    // Predicated region
    $region37: #{up_forward.3} parent=5 // pred_check
      %p739 = pneg %p738
    $region38: #{up_forward.3} parent=5 // pred_check_branch
      %741 = sbr.rel (%p739) target = $region40
    $region39: #{up_forward.3} parent=5 // pred_region
      %s742 = ssub.s32 %s10, 2
      // Predicated region
      $region41: #{up_forward.3} parent=39 // pred_check
        %p743 = pneg %p86
      $region42: #{up_forward.3} parent=39 // pred_check_branch
        %745 = sbr.rel (%p743) target = $region44
      $region43: #{up_forward.3} parent=39 // pred_region
        %s746 = smul.u32 3, %s16
        %p747 = scmp.lt.s32.totalorder %s746, 5
        %s748 = scalar_select %p747, %s746, 5
        %s749 = smul.addr %s748, 4
        %s750 = scalar_lea.vmem %s2, %s749
      $region44: #{up_forward.3} parent=39 // pred_fallthru
        _
      // Predicated region
      $region45: #{up_forward.3} parent=39 // pred_check
        %p751 = pneg %p112
      $region46: #{up_forward.3} parent=39 // pred_check_branch
        %753 = sbr.rel (%p751) target = $region48
      $region47: #{up_forward.3} parent=39 // pred_region
        %p754 = scmp.lt.s32.totalorder %s16, 1
        %s755 = scalar_select %p754, %s16, 1
        %s756 = smul.addr %s755, 2
        %s757 = scalar_lea.vmem %s3, %s756
      $region48: #{up_forward.3} parent=39 // pred_fallthru
        _
    $region40: #{up_forward.3} parent=5 // pred_fallthru
      _
  $region6: #{up_forward.3} parent=0 // loop_footer
    %s14 = sadd.s32 1, %s10
  $region7: #{up_forward.3} parent=0 // loop_footer_branch
    %9 = sbr.rel target = $region3
  $region8: #{up_forward.3} parent=0 // loop_exit
    _

// kernel: up_forward.4
$region0: #{up_forward.4}
  #allocation0 [shape = 'u32[]', space=smem, size = 0x4, offset = 0x4, fixed_abs, tag = 'smem constant byte address 0x4 - core index']
  #allocation1 [shape = 'u32[72,128]{1,0:T(1,128)}', space=vmem, size = 0x9000, scoped, tag = 'internal scratch']
  %s0 = inlined_call_operand.vmem [shape: bf16[48,128], index: 0, kind: input, shape index: {}]
  %s1 = inlined_call_operand.vmem [shape: f32[1,128], index: 1, kind: input, shape index: {}]
  %s2 = inlined_call_operand.vmem [shape: f32[1,128], index: 2, kind: input, shape index: {}]
  %s3 = inlined_call_operand.vmem [shape: bf16[5,128,128], index: 3, kind: input, shape index: {}]
  %s4 = inlined_call_operand.vmem [shape: bf16[48,128], index: 4, kind: output, shape index: {0}]
  %s5 = inlined_call_operand.vmem [shape: f32[2,2,128], index: 5, kind: output, shape index: {1}]
  %6 = xla_tuple %s4, %s5
  %s7 = sld [smem:[#allocation0]]
  $region57: #{up_forward.4} parent=0
    _
  %s9 = ssub.s32 1, %s7
  %s10 = scalar_select 0, %s9, %s7
  loop: start=0, step=1, limit=4
  $region2: #{up_forward.4} parent=0 // loop_pre_header
    _
  $region3: #{up_forward.4} parent=0 // loop_header
    %s12 = sphi 0, %s16
    %p13 = scmp.ge.s32.totalorder %s12, 4
    %s22 = sphi 0, %s24
    %s25 = sphi 0, %s22
    %s26 = sphi 0, %s25
    %s42 = sphi 0, %s26
    %s46 = sphi 0, %s46
    %s48 = sphi 0, %s46
    %s49 = sphi 0, %s48
    %s63 = sphi 0, %s49
    %s67 = sphi 0, %s67
    %s69 = sphi 0, %s67
    %s70 = sphi 0, %s69
    %s84 = sphi 0, %s70
    %s88 = sphi 0, %s88
    %s90 = sphi 0, %s88
    %s91 = sphi 0, %s90
    %s105 = sphi 0, %s91
    %s111 = sphi 0, %s113
    %s114 = sphi 0, %s111
    %s115 = sphi 0, %s114
    %s131 = sphi 0, %s115
    %s137 = sphi 0, %s139
    %s140 = sphi 0, %s137
    %s141 = sphi 0, %s140
    %s157 = sphi 0, %s141
  $region4: #{up_forward.4} parent=0 // loop_header_branch
    %15 = sbr.rel (%p13) target = $region8
  $region5: #{up_forward.4} parent=0 // loop_body
    %s17 = ssub.s32 %s12, 1
    %s18 = ssub.s32 %s12, 2
    %s19 = sadd.s32 %s12, 1
    %s20 = ssub.s32 %s12, %s19
    %p21 = scmp.eq.s32.totalorder %s20, 0
    %s23 = sadd.s32 %s22, 1
    %s24 = scalar_select %p21, %s22, %s23
    %p27 = pneg %p21
    %p28 = scmp.eq.s32.totalorder %s12, 1
    %p29 = por %p27, %p28
    %p30 = scmp.ne.s32.totalorder %s22, %s25
    %p31 = scmp.eq.s32.totalorder %s12, 0
    %p32 = por %p30, %p31
    %p33 = scmp.ne.s32.totalorder %s22, %s25
    %p34 = scmp.eq.s32.totalorder %s17, 1
    %p35 = por %p33, %p34
    %p36 = scmp.ne.s32.totalorder %s25, %s26
    %p37 = scmp.eq.s32.totalorder %s17, 0
    %p38 = por %p36, %p37
    %p39 = scmp.ne.s32.totalorder %s25, %s26
    %p40 = scmp.eq.s32.totalorder %s18, 1
    %p41 = por %p39, %p40
    %p43 = scmp.ne.s32.totalorder %s26, %s42
    %p44 = scmp.eq.s32.totalorder %s18, 0
    %p45 = por %p43, %p44
    %s47 = sadd.s32 %s46, 1
    %p50 = scmp.eq.s32.totalorder %s12, 1
    %p51 = scmp.ne.s32.totalorder %s46, %s48
    %p52 = scmp.eq.s32.totalorder %s12, 0
    %p53 = por %p51, %p52
    %p54 = scmp.ne.s32.totalorder %s46, %s48
    %p55 = scmp.eq.s32.totalorder %s17, 1
    %p56 = por %p54, %p55
    %p57 = scmp.ne.s32.totalorder %s48, %s49
    %p58 = scmp.eq.s32.totalorder %s17, 0
    %p59 = por %p57, %p58
    %p60 = scmp.ne.s32.totalorder %s48, %s49
    %p61 = scmp.eq.s32.totalorder %s18, 1
    %p62 = por %p60, %p61
    %p64 = scmp.ne.s32.totalorder %s49, %s63
    %p65 = scmp.eq.s32.totalorder %s18, 0
    %p66 = por %p64, %p65
    %s68 = sadd.s32 %s67, 1
    %p71 = scmp.eq.s32.totalorder %s12, 1
    %p72 = scmp.ne.s32.totalorder %s67, %s69
    %p73 = scmp.eq.s32.totalorder %s12, 0
    %p74 = por %p72, %p73
    %p75 = scmp.ne.s32.totalorder %s67, %s69
    %p76 = scmp.eq.s32.totalorder %s17, 1
    %p77 = por %p75, %p76
    %p78 = scmp.ne.s32.totalorder %s69, %s70
    %p79 = scmp.eq.s32.totalorder %s17, 0
    %p80 = por %p78, %p79
    %p81 = scmp.ne.s32.totalorder %s69, %s70
    %p82 = scmp.eq.s32.totalorder %s18, 1
    %p83 = por %p81, %p82
    %p85 = scmp.ne.s32.totalorder %s70, %s84
    %p86 = scmp.eq.s32.totalorder %s18, 0
    %p87 = por %p85, %p86
    %s89 = sadd.s32 %s88, 1
    %p92 = scmp.eq.s32.totalorder %s12, 1
    %p93 = scmp.ne.s32.totalorder %s88, %s90
    %p94 = scmp.eq.s32.totalorder %s12, 0
    %p95 = por %p93, %p94
    %p96 = scmp.ne.s32.totalorder %s88, %s90
    %p97 = scmp.eq.s32.totalorder %s17, 1
    %p98 = por %p96, %p97
    %p99 = scmp.ne.s32.totalorder %s90, %s91
    %p100 = scmp.eq.s32.totalorder %s17, 0
    %p101 = por %p99, %p100
    %p102 = scmp.ne.s32.totalorder %s90, %s91
    %p103 = scmp.eq.s32.totalorder %s18, 1
    %p104 = por %p102, %p103
    %p106 = scmp.ne.s32.totalorder %s91, %s105
    %p107 = scmp.eq.s32.totalorder %s18, 0
    %p108 = por %p106, %p107
    %s109 = ssub.s32 %s12, %s19
    %p110 = scmp.eq.s32.totalorder %s109, 0
    %s112 = sadd.s32 %s111, 1
    %s113 = scalar_select %p110, %s111, %s112
    %p116 = pneg %p110
    %p117 = scmp.eq.s32.totalorder %s12, 1
    %p118 = por %p116, %p117
    %p119 = scmp.ne.s32.totalorder %s111, %s114
    %p120 = scmp.eq.s32.totalorder %s12, 0
    %p121 = por %p119, %p120
    %p122 = scmp.ne.s32.totalorder %s111, %s114
    %p123 = scmp.eq.s32.totalorder %s17, 1
    %p124 = por %p122, %p123
    %p125 = scmp.ne.s32.totalorder %s114, %s115
    %p126 = scmp.eq.s32.totalorder %s17, 0
    %p127 = por %p125, %p126
    %p128 = scmp.ne.s32.totalorder %s114, %s115
    %p129 = scmp.eq.s32.totalorder %s18, 1
    %p130 = por %p128, %p129
    %p132 = scmp.ne.s32.totalorder %s115, %s131
    %p133 = scmp.eq.s32.totalorder %s18, 0
    %p134 = por %p132, %p133
    %s135 = ssub.s32 %s12, %s19
    %p136 = scmp.eq.s32.totalorder %s135, 0
    %s138 = sadd.s32 %s137, 1
    %s139 = scalar_select %p136, %s137, %s138
    %p142 = pneg %p136
    %p143 = scmp.eq.s32.totalorder %s12, 1
    %p144 = por %p142, %p143
    %p145 = scmp.ne.s32.totalorder %s137, %s140
    %p146 = scmp.eq.s32.totalorder %s12, 0
    %p147 = por %p145, %p146
    %p148 = scmp.ne.s32.totalorder %s137, %s140
    %p149 = scmp.eq.s32.totalorder %s17, 1
    %p150 = por %p148, %p149
    %p151 = scmp.ne.s32.totalorder %s140, %s141
    %p152 = scmp.eq.s32.totalorder %s17, 0
    %p153 = por %p151, %p152
    %p154 = scmp.ne.s32.totalorder %s140, %s141
    %p155 = scmp.eq.s32.totalorder %s18, 1
    %p156 = por %p154, %p155
    %p158 = scmp.ne.s32.totalorder %s141, %s157
    %p159 = scmp.eq.s32.totalorder %s18, 0
    %p160 = por %p158, %p159
    %p161 = scmp.le.s32.totalorder 1, %s12
    %p162 = scmp.lt.s32.totalorder %s12, 3
    %p163 = pnand %p161, %p162
    %p164 = pneg %p163
    // Predicated region
    $region9: #{up_forward.4} parent=5 // pred_check
      _
    $region10: #{up_forward.4} parent=5 // pred_check_branch
      %166 = sbr.rel (%p163) target = $region12
    $region11: #{up_forward.4} parent=5 // pred_region
      %s167 = ssub.s32 %s12, 1
      // Predicated region
      $region13: #{up_forward.4} parent=11 // pred_check
        %p168 = pneg %p59
      $region14: #{up_forward.4} parent=11 // pred_check_branch
        %170 = sbr.rel (%p168) target = $region16
      $region15: #{up_forward.4} parent=11 // pred_region
        _
      $region16: #{up_forward.4} parent=11 // pred_fallthru
        _
      // Predicated region
      $region17: #{up_forward.4} parent=11 // pred_check
        %p171 = pneg %p80
      $region18: #{up_forward.4} parent=11 // pred_check_branch
        %173 = sbr.rel (%p171) target = $region20
      $region19: #{up_forward.4} parent=11 // pred_region
        _
      $region20: #{up_forward.4} parent=11 // pred_fallthru
        _
      // Predicated region
      $region21: #{up_forward.4} parent=11 // pred_check
        %p174 = pneg %p101
      $region22: #{up_forward.4} parent=11 // pred_check_branch
        %176 = sbr.rel (%p174) target = $region24
      $region23: #{up_forward.4} parent=11 // pred_region
        _
      $region24: #{up_forward.4} parent=11 // pred_fallthru
        _
    $region12: #{up_forward.4} parent=5 // pred_fallthru
      _
    %p177 = scmp.lt.s32.totalorder %s12, 2
    // Predicated region
    $region25: #{up_forward.4} parent=5 // pred_check
      %p178 = pneg %p177
    $region26: #{up_forward.4} parent=5 // pred_check_branch
      %180 = sbr.rel (%p178) target = $region28
    $region27: #{up_forward.4} parent=5 // pred_region
      // Predicated region
      $region29: #{up_forward.4} parent=27 // pred_check
        %p181 = pneg %p32
      $region30: #{up_forward.4} parent=27 // pred_check_branch
        %183 = sbr.rel (%p181) target = $region32
      $region31: #{up_forward.4} parent=27 // pred_region
        %s184 = smul.u32 3, %s12
        %p185 = scmp.lt.s32.totalorder %s184, 5
        %s186 = scalar_select %p185, %s184, 5
        %s187 = smul.addr %s186, 4
        %s188 = scalar_lea.vmem %s0, %s187
        %s189 = smul.u32 3, %s12
      $region32: #{up_forward.4} parent=27 // pred_fallthru
        _
    $region28: #{up_forward.4} parent=5 // pred_fallthru
      _
    %p190 = scmp.le.s32.totalorder 1, %s12
    %p191 = scmp.lt.s32.totalorder %s12, 3
    %p192 = pnand %p190, %p191
    %p193 = pneg %p192
    // Predicated region
    $region33: #{up_forward.4} parent=5 // pred_check
      _
    $region34: #{up_forward.4} parent=5 // pred_check_branch
      %195 = sbr.rel (%p192) target = $region36
    $region35: #{up_forward.4} parent=5 // pred_region
      %s196 = ssub.s32 %s12, 1
      %s197 = smul.u32 3, %s17
      %p198 = scmp.lt.s32.totalorder %s197, 5
      %s199 = scalar_select %p198, %s197, 5
      %s200 = smul.addr %s199, 4
      %s201 = scalar_lea.vmem %s0, %s200
      %p202 = pneg %p38
      %p203 = pneg %p35
      %p204 = pneg %p59
      %p205 = pneg %p56
      %p206 = pneg %p80
      %p207 = pneg %p77
      %p208 = pneg %p101
      %p209 = pneg %p98
      %p210 = pneg %p127
      %p211 = pneg %p124
      %s212 = smul.u32 3, %s17
      %p213 = scmp.lt.s32.totalorder %s212, 5
      %s214 = scalar_select %p213, %s212, 5
      %s215 = smul.addr %s214, 4
      %s216 = scalar_lea.vmem %s4, %s215
      %p217 = pneg %p153
      %p218 = pneg %p150
      %p219 = scmp.lt.s32.totalorder %s17, 1
      %s220 = scalar_select %p219, %s17, 1
      %s221 = smul.addr %s220, 2
      %s222 = scalar_lea.vmem %s5, %s221
      %s223 = smul.u32 3, %s17
      %p224 = scmp.lt.s32.totalorder %s223, 5
      %s225 = scalar_select %p224, %s223, 5
      %s226 = smul.addr %s225, 4
      %s227 = scalar_lea.vmem %s0, %s226
      %s228 = smul.u32 3, %s17
      %s229 = smul.u32 3, %s17
      %p230 = scmp.lt.s32.totalorder %s229, 5
      %s231 = scalar_select %p230, %s229, 5
      %s232 = smul.addr %s231, 4
      %s233 = scalar_lea.vmem %s4, %s232
      %s234 = smul.u32 3, %s17
      %p235 = scmp.lt.s32.totalorder %s17, 1
      %s236 = scalar_select %p235, %s17, 1
      %s237 = smul.addr %s236, 2
      %s238 = scalar_lea.vmem %s5, %s237
      %v240 = vlaneseq
      %v241 = vshrl.u32 %v240, 7
      %v242 = vadd.s32 %v241, 8
      %v243 = vadd.s32 %v241, 16
      %vm244 = vcmp.ge.s32.totalorder %v241, 2
      %vm245 = vcmp.ge.s32.totalorder %v242, 2
      %vm246 = vcmp.ge.s32.totalorder %v243, 2
      %vm247 = vcmp.lt.s32.totalorder %v241, 18
      %vm248 = vcmp.lt.s32.totalorder %v242, 18
      %vm249 = vcmp.lt.s32.totalorder %v243, 18
      %vm250 = vmand %vm244, %vm247
      %vm251 = vmand %vm245, %vm248
      %vm252 = vmand %vm246, %vm249
      %v253 = vld [vmem:[%s227] sm:$0xf]
      %v254 = vld [vmem:[%s227 + $0x4] sm:$0xf]
      %v255 = vld [vmem:[%s227 + $0x8] sm:$0xf]
      %v256 = vunpack.c.l.bf16 %v253
      %v257 = vunpack.c.l.bf16 %v254
      %v258 = vunpack.c.l.bf16 %v255
      %v259 = vld [vmem:[%s1] sm:$0x1]
      %v261 = vperm.slane %v259, 0
      %v263 = vmul.f32 %v256, %v261
      %v264 = vmul.f32 %v257, %v261
      %v265 = vmul.f32 %v258, %v261
      %v266 = vld [vmem:[%s2] sm:$0x1]
      %v268 = vperm.slane %v266, 0
      %v270 = vadd.f32 %v263, %v268
      %v271 = vadd.f32 %v264, %v268
      %v272 = vadd.f32 %v265, %v268
      %v273 = vmax.f32 %v270, 0.0
      %v274 = vmax.f32 %v271, 0.0
      %v275 = vmax.f32 %v272, 0.0
      %v276 = vsel %vm250, 1, 0
      %v277 = vsel %vm251, 1, 0
      %v278 = vsel %vm252, 1, 0
      %vm279 = vcmp.eq.s32.totalorder %v276, 1
      %vm280 = vcmp.eq.s32.totalorder %v277, 1
      %vm281 = vcmp.eq.s32.totalorder %v278, 1
      %v282 = vsel %vm279, %v273, 0.0
      %v283 = vsel %vm280, %v274, 0.0
      %v284 = vsel %vm281, %v275, 0.0
      %v285 = vpack.c.bf16 %v282, %v282
      %v286 = vpack.c.bf16 %v283, %v283
      %v287 = vpack.c.bf16 %v284, %v284
      %v291 = vunpack.c.l.b16 %v285
      %v292 = vunpack.c.l.b16 %v286
      %v293 = vunpack.c.l.b16 %v287
      %v294 = vpack.c.b16 %v292, %v291
      %v295 = vpack.c.b16 %v293, %v293
      %vm296 = vcmask 1040384
      %v297 = vrot.slane %v294, 7
      %v298 = vrot.slane %v295, 7
      %v299 = vsel %vm296, %v297, %v298
      %vm300 = vcmask 1040384
      %v303 = vsel %vm300, 0, %v297
      %vm305 = vcmask 1044480
      %v307 = vsel %vm305, %v299, 0
      %v309 = vld [vmem:[%s3] sm:$0xf]
      %v310 = vld [vmem:[%s3 + $0x4] sm:$0xf]
      %v311 = vld [vmem:[%s3 + $0x8] sm:$0xf]
      %v312 = vld [vmem:[%s3 + $0xc] sm:$0xf]
      %v313 = vld [vmem:[%s3 + $0x10] sm:$0xf]
      %v314 = vld [vmem:[%s3 + $0x14] sm:$0xf]
      %v315 = vld [vmem:[%s3 + $0x18] sm:$0xf]
      %v316 = vld [vmem:[%s3 + $0x1c] sm:$0xf]
      %v317 = vld [vmem:[%s3 + $0x20] sm:$0xf]
      %v318 = vld [vmem:[%s3 + $0x24] sm:$0xf]
      %v319 = vld [vmem:[%s3 + $0x28] sm:$0xf]
      %v320 = vld [vmem:[%s3 + $0x2c] sm:$0xf]
      %v321 = vld [vmem:[%s3 + $0x30] sm:$0xf]
      %v322 = vld [vmem:[%s3 + $0x34] sm:$0xf]
      %v323 = vld [vmem:[%s3 + $0x38] sm:$0xf]
      %v324 = vld [vmem:[%s3 + $0x3c] sm:$0xf]
      %s325 = scalar_lea.vmem %s3, 64
      %v326 = vld [vmem:[%s325] sm:$0xf]
      %v327 = vld [vmem:[%s325 + $0x4] sm:$0xf]
      %v328 = vld [vmem:[%s325 + $0x8] sm:$0xf]
      %v329 = vld [vmem:[%s325 + $0xc] sm:$0xf]
      %v330 = vld [vmem:[%s325 + $0x10] sm:$0xf]
      %v331 = vld [vmem:[%s325 + $0x14] sm:$0xf]
      %v332 = vld [vmem:[%s325 + $0x18] sm:$0xf]
      %v333 = vld [vmem:[%s325 + $0x1c] sm:$0xf]
      %v334 = vld [vmem:[%s325 + $0x20] sm:$0xf]
      %v335 = vld [vmem:[%s325 + $0x24] sm:$0xf]
      %v336 = vld [vmem:[%s325 + $0x28] sm:$0xf]
      %v337 = vld [vmem:[%s325 + $0x2c] sm:$0xf]
      %v338 = vld [vmem:[%s325 + $0x30] sm:$0xf]
      %v339 = vld [vmem:[%s325 + $0x34] sm:$0xf]
      %v340 = vld [vmem:[%s325 + $0x38] sm:$0xf]
      %v341 = vld [vmem:[%s325 + $0x3c] sm:$0xf]
      %vm342 = vsmask.f32 7424
      %v343 = vshrl.u32 %v303, 16
      %v345 = vshll.u32 %v303, 16
      %v347 = vrot.slane %v345, 1
      %v348 = vor.u32 %v343, %v347
      %v349 = vshll.u32 %v307, 16
      %v351 = vrot.slane %v349, 1
      %v352 = vsel %vm342, %v348, %v351
      %v353 = vshrl.u32 %v307, 16
      %v355 = vor.u32 %v353, %v351
      %v374 = vunpack.c.l.b16 %v326
      %v375 = vunpack.c.l.b16 %v327
      %v376 = vunpack.c.l.b16 %v328
      %v377 = vunpack.c.l.b16 %v329
      %v378 = vunpack.c.l.b16 %v330
      %v379 = vunpack.c.l.b16 %v331
      %v380 = vunpack.c.l.b16 %v332
      %v381 = vunpack.c.l.b16 %v333
      %v382 = vunpack.c.l.b16 %v334
      %v383 = vunpack.c.l.b16 %v335
      %v384 = vunpack.c.l.b16 %v336
      %v385 = vunpack.c.l.b16 %v337
      %v386 = vunpack.c.l.b16 %v338
      %v387 = vunpack.c.l.b16 %v339
      %v388 = vunpack.c.l.b16 %v340
      %v389 = vunpack.c.l.b16 %v341
      %v390 = vpack.c.b16 %v375, %v374
      %v391 = vpack.c.b16 %v377, %v376
      %v392 = vpack.c.b16 %v379, %v378
      %v393 = vpack.c.b16 %v381, %v380
      %v394 = vpack.c.b16 %v383, %v382
      %v395 = vpack.c.b16 %v385, %v384
      %v396 = vpack.c.b16 %v387, %v386
      %v397 = vpack.c.b16 %v389, %v388
      %406 = vmatpush.bf16.msra.mxu0 %v397
      %407 = vmatpush.bf16.msra.mxu0 %v396
      %408 = vmatpush.bf16.msra.mxu0 %v395
      %409 = vmatpush.bf16.msra.mxu0 %v394
      %410 = vmatpush.bf16.msra.mxu0 %v393
      %411 = vmatpush.bf16.msra.mxu0 %v392
      %412 = vmatpush.bf16.msra.mxu0 %v391
      %413 = vmatpush.bf16.msra.mxu0 %v390
      %414 = vmatmul.bf16.gmra.mxu0 %v352
      %v415 = vpop.f32.mrf.mxu0
      %v416 = vadd.f32 0.0, %v415
      %v417 = vpop.f32.mrf.mxu0
      %v418 = vadd.f32 0.0, %v417
      %419 = vmatmul.bf16.gmra.mxu0 %v355
      %v420 = vpop.f32.mrf.mxu0
      %v421 = vadd.f32 0.0, %v420
      %v422 = vpop.f32.mrf.mxu0
      %423 = vdwg.mxu0
      %v440 = vunpack.c.l.b16 %v309
      %v441 = vunpack.c.l.b16 %v310
      %v442 = vunpack.c.l.b16 %v311
      %v443 = vunpack.c.l.b16 %v312
      %v444 = vunpack.c.l.b16 %v313
      %v445 = vunpack.c.l.b16 %v314
      %v446 = vunpack.c.l.b16 %v315
      %v447 = vunpack.c.l.b16 %v316
      %v448 = vunpack.c.l.b16 %v317
      %v449 = vunpack.c.l.b16 %v318
      %v450 = vunpack.c.l.b16 %v319
      %v451 = vunpack.c.l.b16 %v320
      %v452 = vunpack.c.l.b16 %v321
      %v453 = vunpack.c.l.b16 %v322
      %v454 = vunpack.c.l.b16 %v323
      %v455 = vunpack.c.l.b16 %v324
      %v456 = vpack.c.b16 %v441, %v440
      %v457 = vpack.c.b16 %v443, %v442
      %v458 = vpack.c.b16 %v445, %v444
      %v459 = vpack.c.b16 %v447, %v446
      %v460 = vpack.c.b16 %v449, %v448
      %v461 = vpack.c.b16 %v451, %v450
      %v462 = vpack.c.b16 %v453, %v452
      %v463 = vpack.c.b16 %v455, %v454
      %472 = vmatpush.bf16.msra.mxu0 %v463
      %473 = vmatpush.bf16.msra.mxu0 %v462
      %474 = vmatpush.bf16.msra.mxu0 %v461
      %475 = vmatpush.bf16.msra.mxu0 %v460
      %476 = vmatpush.bf16.msra.mxu0 %v459
      %477 = vmatpush.bf16.msra.mxu0 %v458
      %478 = vmatpush.bf16.msra.mxu0 %v457
      %479 = vmatpush.bf16.msra.mxu0 %v456
      %480 = vmatmul.bf16.gmra.mxu0 %v303
      %v481 = vpop.f32.mrf.mxu0
      %v482 = vadd.f32 %v416, %v481
      %v483 = vpop.f32.mrf.mxu0
      %v484 = vadd.f32 %v418, %v483
      %485 = vmatmul.bf16.gmra.mxu0 %v307
      %v486 = vpop.f32.mrf.mxu0
      %v487 = vadd.f32 %v421, %v486
      %v488 = vpop.f32.mrf.mxu0
      %489 = vdwg.mxu0
      %s490 = scalar_lea.vmem %s3, 128
      %v491 = vld [vmem:[%s490] sm:$0xf]
      %v492 = vld [vmem:[%s490 + $0x4] sm:$0xf]
      %v493 = vld [vmem:[%s490 + $0x8] sm:$0xf]
      %v494 = vld [vmem:[%s490 + $0xc] sm:$0xf]
      %v495 = vld [vmem:[%s490 + $0x10] sm:$0xf]
      %v496 = vld [vmem:[%s490 + $0x14] sm:$0xf]
      %v497 = vld [vmem:[%s490 + $0x18] sm:$0xf]
      %v498 = vld [vmem:[%s490 + $0x1c] sm:$0xf]
      %v499 = vld [vmem:[%s490 + $0x20] sm:$0xf]
      %v500 = vld [vmem:[%s490 + $0x24] sm:$0xf]
      %v501 = vld [vmem:[%s490 + $0x28] sm:$0xf]
      %v502 = vld [vmem:[%s490 + $0x2c] sm:$0xf]
      %v503 = vld [vmem:[%s490 + $0x30] sm:$0xf]
      %v504 = vld [vmem:[%s490 + $0x34] sm:$0xf]
      %v505 = vld [vmem:[%s490 + $0x38] sm:$0xf]
      %v506 = vld [vmem:[%s490 + $0x3c] sm:$0xf]
      %vm509 = vcmask 1046528
      %v510 = vrot.slane %v303, 1
      %v511 = vrot.slane %v307, 1
      %v512 = vsel %vm509, %v510, %v511
      %v531 = vunpack.c.l.b16 %v491
      %v532 = vunpack.c.l.b16 %v492
      %v533 = vunpack.c.l.b16 %v493
      %v534 = vunpack.c.l.b16 %v494
      %v535 = vunpack.c.l.b16 %v495
      %v536 = vunpack.c.l.b16 %v496
      %v537 = vunpack.c.l.b16 %v497
      %v538 = vunpack.c.l.b16 %v498
      %v539 = vunpack.c.l.b16 %v499
      %v540 = vunpack.c.l.b16 %v500
      %v541 = vunpack.c.l.b16 %v501
      %v542 = vunpack.c.l.b16 %v502
      %v543 = vunpack.c.l.b16 %v503
      %v544 = vunpack.c.l.b16 %v504
      %v545 = vunpack.c.l.b16 %v505
      %v546 = vunpack.c.l.b16 %v506
      %v547 = vpack.c.b16 %v532, %v531
      %v548 = vpack.c.b16 %v534, %v533
      %v549 = vpack.c.b16 %v536, %v535
      %v550 = vpack.c.b16 %v538, %v537
      %v551 = vpack.c.b16 %v540, %v539
      %v552 = vpack.c.b16 %v542, %v541
      %v553 = vpack.c.b16 %v544, %v543
      %v554 = vpack.c.b16 %v546, %v545
      %563 = vmatpush.bf16.msra.mxu0 %v554
      %564 = vmatpush.bf16.msra.mxu0 %v553
      %565 = vmatpush.bf16.msra.mxu0 %v552
      %566 = vmatpush.bf16.msra.mxu0 %v551
      %567 = vmatpush.bf16.msra.mxu0 %v550
      %568 = vmatpush.bf16.msra.mxu0 %v549
      %569 = vmatpush.bf16.msra.mxu0 %v548
      %570 = vmatpush.bf16.msra.mxu0 %v547
      %571 = vmatmul.bf16.gmra.mxu0 %v512
      %v572 = vpop.f32.mrf.mxu0
      %v573 = vadd.f32 0.0, %v572
      %v574 = vpop.f32.mrf.mxu0
      %v575 = vadd.f32 0.0, %v574
      %576 = vmatmul.bf16.gmra.mxu0 %v511
      %v577 = vpop.f32.mrf.mxu0
      %v578 = vadd.f32 0.0, %v577
      %v579 = vpop.f32.mrf.mxu0
      %580 = vdwg.mxu0
      %v581 = vadd.f32 %v482, %v573
      %v582 = vadd.f32 %v484, %v575
      %v583 = vadd.f32 %v487, %v578
      %s584 = scalar_lea.vmem %s3, 192
      %v585 = vld [vmem:[%s584] sm:$0xf]
      %v586 = vld [vmem:[%s584 + $0x4] sm:$0xf]
      %v587 = vld [vmem:[%s584 + $0x8] sm:$0xf]
      %v588 = vld [vmem:[%s584 + $0xc] sm:$0xf]
      %v589 = vld [vmem:[%s584 + $0x10] sm:$0xf]
      %v590 = vld [vmem:[%s584 + $0x14] sm:$0xf]
      %v591 = vld [vmem:[%s584 + $0x18] sm:$0xf]
      %v592 = vld [vmem:[%s584 + $0x1c] sm:$0xf]
      %v593 = vld [vmem:[%s584 + $0x20] sm:$0xf]
      %v594 = vld [vmem:[%s584 + $0x24] sm:$0xf]
      %v595 = vld [vmem:[%s584 + $0x28] sm:$0xf]
      %v596 = vld [vmem:[%s584 + $0x2c] sm:$0xf]
      %v597 = vld [vmem:[%s584 + $0x30] sm:$0xf]
      %v598 = vld [vmem:[%s584 + $0x34] sm:$0xf]
      %v599 = vld [vmem:[%s584 + $0x38] sm:$0xf]
      %v600 = vld [vmem:[%s584 + $0x3c] sm:$0xf]
      %vm601 = vsmask.f32 6400
      %v602 = vrot.slane %v343, 1
      %v603 = vrot.slane %v345, 2
      %v604 = vor.u32 %v602, %v603
      %v605 = vrot.slane %v353, 1
      %v606 = vrot.slane %v349, 2
      %v607 = vor.u32 %v605, %v606
      %v608 = vsel %vm601, %v604, %v607
      %v627 = vunpack.c.l.b16 %v585
      %v628 = vunpack.c.l.b16 %v586
      %v629 = vunpack.c.l.b16 %v587
      %v630 = vunpack.c.l.b16 %v588
      %v631 = vunpack.c.l.b16 %v589
      %v632 = vunpack.c.l.b16 %v590
      %v633 = vunpack.c.l.b16 %v591
      %v634 = vunpack.c.l.b16 %v592
      %v635 = vunpack.c.l.b16 %v593
      %v636 = vunpack.c.l.b16 %v594
      %v637 = vunpack.c.l.b16 %v595
      %v638 = vunpack.c.l.b16 %v596
      %v639 = vunpack.c.l.b16 %v597
      %v640 = vunpack.c.l.b16 %v598
      %v641 = vunpack.c.l.b16 %v599
      %v642 = vunpack.c.l.b16 %v600
      %v643 = vpack.c.b16 %v628, %v627
      %v644 = vpack.c.b16 %v630, %v629
      %v645 = vpack.c.b16 %v632, %v631
      %v646 = vpack.c.b16 %v634, %v633
      %v647 = vpack.c.b16 %v636, %v635
      %v648 = vpack.c.b16 %v638, %v637
      %v649 = vpack.c.b16 %v640, %v639
      %v650 = vpack.c.b16 %v642, %v641
      %659 = vmatpush.bf16.msra.mxu0 %v650
      %660 = vmatpush.bf16.msra.mxu0 %v649
      %661 = vmatpush.bf16.msra.mxu0 %v648
      %662 = vmatpush.bf16.msra.mxu0 %v647
      %663 = vmatpush.bf16.msra.mxu0 %v646
      %664 = vmatpush.bf16.msra.mxu0 %v645
      %665 = vmatpush.bf16.msra.mxu0 %v644
      %666 = vmatpush.bf16.msra.mxu0 %v643
      %667 = vmatmul.bf16.gmra.mxu0 %v608
      %v668 = vpop.f32.mrf.mxu0
      %v669 = vadd.f32 0.0, %v668
      %v670 = vpop.f32.mrf.mxu0
      %v671 = vadd.f32 0.0, %v670
      %672 = vmatmul.bf16.gmra.mxu0 %v607
      %v673 = vpop.f32.mrf.mxu0
      %v674 = vadd.f32 0.0, %v673
      %v675 = vpop.f32.mrf.mxu0
      %676 = vdwg.mxu0
      %v677 = vadd.f32 %v581, %v669
      %v678 = vadd.f32 %v582, %v671
      %v679 = vadd.f32 %v583, %v674
      %s680 = scalar_lea.vmem %s3, 256
      %v681 = vld [vmem:[%s680] sm:$0xf]
      %v682 = vld [vmem:[%s680 + $0x4] sm:$0xf]
      %v683 = vld [vmem:[%s680 + $0x8] sm:$0xf]
      %v684 = vld [vmem:[%s680 + $0xc] sm:$0xf]
      %v685 = vld [vmem:[%s680 + $0x10] sm:$0xf]
      %v686 = vld [vmem:[%s680 + $0x14] sm:$0xf]
      %v687 = vld [vmem:[%s680 + $0x18] sm:$0xf]
      %v688 = vld [vmem:[%s680 + $0x1c] sm:$0xf]
      %v689 = vld [vmem:[%s680 + $0x20] sm:$0xf]
      %v690 = vld [vmem:[%s680 + $0x24] sm:$0xf]
      %v691 = vld [vmem:[%s680 + $0x28] sm:$0xf]
      %v692 = vld [vmem:[%s680 + $0x2c] sm:$0xf]
      %v693 = vld [vmem:[%s680 + $0x30] sm:$0xf]
      %v694 = vld [vmem:[%s680 + $0x34] sm:$0xf]
      %v695 = vld [vmem:[%s680 + $0x38] sm:$0xf]
      %v696 = vld [vmem:[%s680 + $0x3c] sm:$0xf]
      %vm697 = vcmask 1045504
      %v698 = vrot.slane %v303, 2
      %v699 = vrot.slane %v307, 2
      %v700 = vsel %vm697, %v698, %v699
      %v719 = vunpack.c.l.b16 %v681
      %v720 = vunpack.c.l.b16 %v682
      %v721 = vunpack.c.l.b16 %v683
      %v722 = vunpack.c.l.b16 %v684
      %v723 = vunpack.c.l.b16 %v685
      %v724 = vunpack.c.l.b16 %v686
      %v725 = vunpack.c.l.b16 %v687
      %v726 = vunpack.c.l.b16 %v688
      %v727 = vunpack.c.l.b16 %v689
      %v728 = vunpack.c.l.b16 %v690
      %v729 = vunpack.c.l.b16 %v691
      %v730 = vunpack.c.l.b16 %v692
      %v731 = vunpack.c.l.b16 %v693
      %v732 = vunpack.c.l.b16 %v694
      %v733 = vunpack.c.l.b16 %v695
      %v734 = vunpack.c.l.b16 %v696
      %v735 = vpack.c.b16 %v720, %v719
      %v736 = vpack.c.b16 %v722, %v721
      %v737 = vpack.c.b16 %v724, %v723
      %v738 = vpack.c.b16 %v726, %v725
      %v739 = vpack.c.b16 %v728, %v727
      %v740 = vpack.c.b16 %v730, %v729
      %v741 = vpack.c.b16 %v732, %v731
      %v742 = vpack.c.b16 %v734, %v733
      %751 = vmatpush.bf16.msra.mxu0 %v742
      %752 = vmatpush.bf16.msra.mxu0 %v741
      %753 = vmatpush.bf16.msra.mxu0 %v740
      %754 = vmatpush.bf16.msra.mxu0 %v739
      %755 = vmatpush.bf16.msra.mxu0 %v738
      %756 = vmatpush.bf16.msra.mxu0 %v737
      %757 = vmatpush.bf16.msra.mxu0 %v736
      %758 = vmatpush.bf16.msra.mxu0 %v735
      %759 = vmatmul.bf16.gmra.mxu0 %v700
      %v760 = vpop.f32.mrf.mxu0
      %v761 = vadd.f32 0.0, %v760
      %v762 = vpop.f32.mrf.mxu0
      %v763 = vadd.f32 0.0, %v762
      %764 = vmatmul.bf16.gmra.mxu0 %v699
      %v765 = vpop.f32.mrf.mxu0
      %v766 = vadd.f32 0.0, %v765
      %v767 = vpop.f32.mrf.mxu0
      %768 = vdwg.mxu0
      %v769 = vadd.f32 %v677, %v761
      %v770 = vadd.f32 %v678, %v763
      %v771 = vadd.f32 %v679, %v766
      %v772 = vsel %vm279, %v769, 0.0
      %v773 = vsel %vm280, %v770, 0.0
      %v774 = vsel %vm281, %v771, 0.0
      %v775 = vpack.c.bf16 %v772, %v772
      %v776 = vpack.c.bf16 %v773, %v773
      %v777 = vpack.c.bf16 %v774, %v774
      %778 = vst [vmem:[%s233] sm:$0xf] %v775
      %779 = vst [vmem:[%s233 + $0x4] sm:$0xf] %v776
      %780 = vst [vmem:[%s233 + $0x8] sm:$0xf] %v777
      %v781 = vadd.f32 %v772, %v773
      %v782 = vadd.f32 %v781, %v774
      %v783 = vrot.slane %v782, 4
      %v784 = vadd.f32 %v782, %v783
      %v785 = vrot.slane %v784, 2
      %v786 = vadd.f32 %v784, %v785
      %v787 = vrot.slane %v786, 1
      %v788 = vadd.f32 %v786, %v787
      %v789 = vmul.f32 %v772, %v772
      %v790 = vmul.f32 %v773, %v773
      %v791 = vmul.f32 %v774, %v774
      %v792 = vadd.f32 %v789, %v790
      %v793 = vadd.f32 %v792, %v791
      %v794 = vrot.slane %v793, 4
      %v795 = vadd.f32 %v793, %v794
      %v796 = vrot.slane %v795, 2
      %v797 = vadd.f32 %v795, %v796
      %v798 = vrot.slane %v797, 1
      %v799 = vadd.f32 %v797, %v798
      %v800 = vsel %vm300, %v788, %v799
      %801 = vst [vmem:[%s238] sm:$0x3] %v800
      %s802 = smul.u32 3, %s17
      %p803 = scmp.lt.s32.totalorder %s802, 5
      %s804 = scalar_select %p803, %s802, 5
      %s805 = smul.addr %s804, 4
      %s806 = scalar_lea.vmem %s4, %s805
      %p807 = scmp.lt.s32.totalorder %s17, 1
      %s808 = scalar_select %p807, %s17, 1
      %s809 = smul.addr %s808, 2
      %s810 = scalar_lea.vmem %s5, %s809
      // Predicated region
      $region37: #{up_forward.4} parent=35 // pred_check
        %p811 = pneg %p124
      $region38: #{up_forward.4} parent=35 // pred_check_branch
        %813 = sbr.rel (%p811) target = $region40
      $region39: #{up_forward.4} parent=35 // pred_region
        %s814 = smul.u32 3, %s17
      $region40: #{up_forward.4} parent=35 // pred_fallthru
        _
      // Predicated region
      $region41: #{up_forward.4} parent=35 // pred_check
        %p815 = pneg %p150
      $region42: #{up_forward.4} parent=35 // pred_check_branch
        %817 = sbr.rel (%p815) target = $region44
      $region43: #{up_forward.4} parent=35 // pred_region
        _
      $region44: #{up_forward.4} parent=35 // pred_fallthru
        _
    $region36: #{up_forward.4} parent=5 // pred_fallthru
      _
    %p818 = scmp.le.s32.totalorder 2, %s12
    // Predicated region
    $region45: #{up_forward.4} parent=5 // pred_check
      %p819 = pneg %p818
    $region46: #{up_forward.4} parent=5 // pred_check_branch
      %821 = sbr.rel (%p819) target = $region48
    $region47: #{up_forward.4} parent=5 // pred_region
      %s822 = ssub.s32 %s12, 2
      // Predicated region
      $region49: #{up_forward.4} parent=47 // pred_check
        %p823 = pneg %p130
      $region50: #{up_forward.4} parent=47 // pred_check_branch
        %825 = sbr.rel (%p823) target = $region52
      $region51: #{up_forward.4} parent=47 // pred_region
        %s826 = smul.u32 3, %s18
        %p827 = scmp.lt.s32.totalorder %s826, 5
        %s828 = scalar_select %p827, %s826, 5
        %s829 = smul.addr %s828, 4
        %s830 = scalar_lea.vmem %s4, %s829
      $region52: #{up_forward.4} parent=47 // pred_fallthru
        _
      // Predicated region
      $region53: #{up_forward.4} parent=47 // pred_check
        %p831 = pneg %p156
      $region54: #{up_forward.4} parent=47 // pred_check_branch
        %833 = sbr.rel (%p831) target = $region56
      $region55: #{up_forward.4} parent=47 // pred_region
        %p834 = scmp.lt.s32.totalorder %s18, 1
        %s835 = scalar_select %p834, %s18, 1
        %s836 = smul.addr %s835, 2
        %s837 = scalar_lea.vmem %s5, %s836
      $region56: #{up_forward.4} parent=47 // pred_fallthru
        _
    $region48: #{up_forward.4} parent=5 // pred_fallthru
      _
  $region6: #{up_forward.4} parent=0 // loop_footer
    %s16 = sadd.s32 1, %s12
  $region7: #{up_forward.4} parent=0 // loop_footer_branch
    %11 = sbr.rel target = $region3
  $region8: #{up_forward.4} parent=0 // loop_exit
    _

</llo_original>
